<compile_context>
chip_gen: v6e
topology: v6e:2x2x1
jax: 0.10.0
libtpu: 0.0.40
codegen_flags: <defaults>
</compile_context>

<pallas_src>
import math

import jax
import jax.numpy as jnp
from jax.experimental import pallas as pl
from jax.experimental.pallas import tpu as pltpu


# Row indices of the packed (6, H) vector-parameter slab.
_BO, _LN1_G, _LN1_B, _B2, _LN2_G, _LN2_B = range(6)
_LN_EPS = 1e-12  # BERT-style encoder convention (PyTorch nn.LayerNorm default is 1e-5)


# ----------------------------------------------------------------------------
# In-kernel exact GELU (PyTorch nn.GELU default is the erf form).
# erf via Abramowitz & Stegun 7.1.26 (|err| < 1.5e-7); only exp/mul/add/where
# plus an EUP-slot approximate reciprocal.
# ----------------------------------------------------------------------------
def _erf(x):
    a1, a2, a3, a4, a5 = 0.254829592, -0.284496736, 1.421413741, -1.453152027, 1.061405429
    p = 0.3275911
    ax = jnp.abs(x)
    t = pl.reciprocal(1.0 + p * ax, approx=True)
    poly = ((((a5 * t + a4) * t + a3) * t + a2) * t + a1) * t
    y = 1.0 - poly * jnp.exp(-ax * ax)
    return jnp.where(x >= 0, y, -y)


def _gelu_exact(x):
    return 0.5 * x * (1.0 + _erf(x * (1.0 / math.sqrt(2.0))))


def _layernorm(x, gamma, beta):
    # Single-pass stats: var = E[x^2] - mu^2 (one fewer dependent cross-lane pass).
    mu = jnp.mean(x, axis=-1, keepdims=True)
    ms = jnp.mean(x * x, axis=-1, keepdims=True)
    var = ms - mu * mu
    return (x - mu) * jax.lax.rsqrt(var + _LN_EPS) * gamma + beta


# ----------------------------------------------------------------------------
# Fused kernel: embedding lookup + one encoder layer + CLS extraction + fc,
# for a whole batch block per grid step.
# ----------------------------------------------------------------------------
def encoder_kernel(ids_ref, tok_emb_ref, pos_ref,
                   wqkv_ref, bqkv_ref, wo_ref, slab_ref,
                   w1_ref, b1_ref, w2_ref, wfc_ref, bfc_ref,
                   out_ref):
    M = ids_ref.shape[0]                 # batch_block * seq rows
    V, H = tok_emb_ref.shape
    S = pos_ref.shape[0]
    TB = M // S
    bf16 = jnp.bfloat16

    slab = slab_ref[...]                 # (6, H) f32
    bo    = slab[_BO:_BO + 1]
    ln1_g = slab[_LN1_G:_LN1_G + 1]
    ln1_b = slab[_LN1_B:_LN1_B + 1]
    b2    = slab[_B2:_B2 + 1]
    ln2_g = slab[_LN2_G:_LN2_G + 1]
    ln2_b = slab[_LN2_B:_LN2_B + 1]

    # --- fused embedding gather (exact: one-hot f32 matmul) + positional add ---
    ids_col = ids_ref[...]                                               # (M, 1) i32
    onehot = (ids_col == jax.lax.broadcasted_iota(jnp.int32, (M, V), 1)
              ).astype(jnp.float32)                                      # (M, V)
    emb2 = jnp.dot(onehot, tok_emb_ref[...],
                   preferred_element_type=jnp.float32)                   # (M, H) exact rows
    x2 = (emb2.reshape(TB, S, H) + pos_ref[...][None, :, :]).reshape(M, H)

    # --- single-head self-attention: fused QKV projection, batched score/attn ---
    qkv = jnp.dot(x2.astype(bf16), wqkv_ref[...],
                  preferred_element_type=jnp.float32) + bqkv_ref[...]    # (M, 3H)
    q = qkv[:, 0:H].reshape(TB, S, H)
    k = qkv[:, H:2 * H].reshape(TB, S, H)
    v = qkv[:, 2 * H:3 * H].reshape(TB, S, H)

    # q @ k^T per batch element: batched contraction over the hidden dim.
    scores = jax.lax.dot_general(
        q.astype(bf16), k.astype(bf16),
        dimension_numbers=(((2,), (2,)), ((0,), (0,))),
        preferred_element_type=jnp.float32) * (1.0 / math.sqrt(H))       # (TB, S, S)

    # softmax in f32; denominator reciprocal on the EUP slot.
    scores = scores - jnp.max(scores, axis=-1, keepdims=True)
    p = jnp.exp(scores)
    p = p * pl.reciprocal(jnp.sum(p, axis=-1, keepdims=True), approx=True)

    attn = jax.lax.dot_general(
        p.astype(bf16), v.astype(bf16),
        dimension_numbers=(((2,), (1,)), ((0,), (0,))),
        preferred_element_type=jnp.float32).reshape(M, H)                # (M, H)
    attn_out = jnp.dot(attn.astype(bf16), wo_ref[...],
                       preferred_element_type=jnp.float32) + bo

    # --- residual + LN1, FFN (exact-erf GELU), residual + LN2 ---
    h = _layernorm(x2 + attn_out, ln1_g, ln1_b)
    f = jnp.dot(h.astype(bf16), w1_ref[...],
                preferred_element_type=jnp.float32) + b1_ref[...]
    f = _gelu_exact(f)
    f = jnp.dot(f.astype(bf16), w2_ref[...],
                preferred_element_type=jnp.float32) + b2
    hn = _layernorm(h + f, ln2_g, ln2_b)

    # --- fused epilogue: embeddings = last_hidden_state[:, 0, :]; fc(embeddings) ---
    cls = hn.reshape(TB, S, H)[:, 0, :]                                  # (TB, H)
    out_ref[...] = jnp.dot(cls.astype(bf16), wfc_ref[...],
                           preferred_element_type=jnp.float32) + bfc_ref[...]


def text_embedding_forward(token_ids, params):
    """token_ids: (B, S) int32 -> (B, embedding_dim) f32 == fc(last_hidden[:, 0, :])."""
    B, S = token_ids.shape
    V, H = params["tok_emb"].shape
    F = params["w1"].shape[1]
    E = params["w_fc"].shape[1]

    # Batch block: fold many (batch*seq) rows into each MXU push.  At tiny B the whole
    # batch collapses into a single grid step; at larger B keep the step count >= 2
    # (multiple of 2) so dimension_semantics=("parallel",) shards across v7x's 2 TCs.
    TB = B if B <= 32 else 32
    assert B % TB == 0, "pad the batch to a multiple of the batch tile"
    M = TB * S

    ids_col = token_ids.reshape(B * S, 1)          # sublane-major ids for in-kernel one-hot

    # Weights use constant index_maps -> one resident VMEM copy across the grid.
    # TODO(synk): at BERT scale, tile the FFN over F-chunks (arbitrary reduction axis)
    # and row-gather the real vocab table instead of keeping it resident.
    full = lambda shape: pl.BlockSpec(shape, lambda b: (0,) * len(shape))
    in_specs = [
        pl.BlockSpec((M, 1), lambda b: (b, 0)),    # token ids (per batch block)
        full((V, H)),                              # tok_emb (whole table resident)
        full((S, H)),                              # pos_emb
        full((H, 3 * H)), full((1, 3 * H)),        # w_qkv, b_qkv (fused QKV)
        full((H, H)),                              # wo
        full((6, H)),                              # packed bo / ln1 / b2 / ln2 slab
        full((H, F)), full((1, F)),                # w1, b1
        full((F, H)),                              # w2   (b2 lives in the slab)
        full((H, E)), full((1, E)),                # w_fc, b_fc
    ]
    out_spec = pl.BlockSpec((TB, E), lambda b: (b, 0))   # lane-dense (E=128) output

    return pl.pallas_call(
        encoder_kernel,
        out_shape=jax.ShapeDtypeStruct((B, E), jnp.float32),
        grid=(B // TB,),
        in_specs=in_specs,
        out_specs=out_spec,
        compiler_params=pltpu.CompilerParams(
            dimension_semantics=("parallel",)),
    )(ids_col,
      params["tok_emb"], params["pos_emb"],
      params["w_qkv"], params["b_qkv"], params["wo"], params["slab"],
      params["w1"], params["b1"], params["w2"],
      params["w_fc"], params["b_fc"])


# ----------------------------------------------------------------------------
# Params (deterministic synthetic encoder; matmul weights bf16, params/stats f32)
# ----------------------------------------------------------------------------
def init_params(key, vocab_size, max_seq, hidden, ff, embedding_dim):
    keys = jax.random.split(key, 8)
    H = hidden

    def w(k, shape):   # matmul weights live in bf16 (MXU-native); accumulate in f32
        return (jax.random.normal(k, shape, jnp.float32) * 0.02).astype(jnp.bfloat16)

    slab = jnp.zeros((6, H), jnp.float32)
    slab = slab.at[_LN1_G].set(1.0).at[_LN2_G].set(1.0)   # LN gammas = 1, biases/betas = 0

    return {
        # TODO(synk): HuggingFace AutoTokenizer / pretrained AutoModel weights have no
        # Pallas equivalent; this is a deterministic synthetic single-layer encoder.
        "tok_emb": jax.random.normal(keys[0], (vocab_size, H), jnp.float32) * 0.02,
        "pos_emb": jax.random.normal(keys[1], (max_seq, H), jnp.float32) * 0.02,
        "w_qkv": w(keys[2], (H, 3 * H)),
        "b_qkv": jnp.zeros((1, 3 * H), jnp.float32),
        "wo": w(keys[3], (H, H)),
        "slab": slab,
        "w1": w(keys[4], (H, ff)), "b1": jnp.zeros((1, ff), jnp.float32),
        "w2": w(keys[5], (ff, H)),
        # fc = nn.Linear(hidden_size, embedding_dim)
        "w_fc": w(keys[6], (H, embedding_dim)),
        "b_fc": jax.random.normal(keys[7], (1, embedding_dim), jnp.float32) * 0.02,
    }


if __name__ == "__main__":
    # Lane-dense small shapes: batch=2, seq=8, hidden=128, ffn=256, embedding_dim=128.
    B, S, H, F, E, V = 2, 8, 128, 256, 128, 128

    key = jax.random.PRNGKey(0)
    k_params, k_tokens = jax.random.split(key)
    params = init_params(k_params, vocab_size=V, max_seq=S, hidden=H, ff=F,
                         embedding_dim=E)
    token_ids = jax.random.randint(k_tokens, (B, S), 0, V, dtype=jnp.int32)

    out = jax.block_until_ready(text_embedding_forward(token_ids, params))
    assert out.shape == (B, E) and out.dtype == jnp.float32
    print("KERNEL_OK")
</pallas_src>

<mosaic_0001>
module attributes {stable_mosaic.version = 11 : i64} {
  func.func @encoder_kernel(%arg0: i32, %arg1: memref<16x1xi32, #tpu.memory_space<vmem>>, %arg2: memref<128x128xf32, #tpu.memory_space<vmem>>, %arg3: memref<8x128xf32, #tpu.memory_space<vmem>>, %arg4: memref<128x384xbf16, #tpu.memory_space<vmem>>, %arg5: memref<1x384xf32, #tpu.memory_space<vmem>>, %arg6: memref<128x128xbf16, #tpu.memory_space<vmem>>, %arg7: memref<6x128xf32, #tpu.memory_space<vmem>>, %arg8: memref<128x256xbf16, #tpu.memory_space<vmem>>, %arg9: memref<1x256xf32, #tpu.memory_space<vmem>>, %arg10: memref<256x128xbf16, #tpu.memory_space<vmem>>, %arg11: memref<128x128xbf16, #tpu.memory_space<vmem>>, %arg12: memref<1x128xf32, #tpu.memory_space<vmem>>, %arg13: memref<2x128xf32, #tpu.memory_space<vmem>>) attributes {dimension_semantics = [#tpu.dimension_semantics<parallel>], iteration_bounds = array<i64: 1>, scalar_prefetch = 0 : i64, scratch_operands = 0 : i64, tpu.core_type = #tpu.core_type<tc>, window_params = [{transform_indices = @transform_0, window_bounds = array<i64: 16, 1>}, {pipeline_mode = #tpu.pipeline_mode<synchronous>, transform_indices = @transform_1, window_bounds = array<i64: 128, 128>}, {pipeline_mode = #tpu.pipeline_mode<synchronous>, transform_indices = @transform_2, window_bounds = array<i64: 8, 128>}, {pipeline_mode = #tpu.pipeline_mode<synchronous>, transform_indices = @transform_3, window_bounds = array<i64: 128, 384>}, {pipeline_mode = #tpu.pipeline_mode<synchronous>, transform_indices = @transform_4, window_bounds = array<i64: 1, 384>}, {pipeline_mode = #tpu.pipeline_mode<synchronous>, transform_indices = @transform_5, window_bounds = array<i64: 128, 128>}, {pipeline_mode = #tpu.pipeline_mode<synchronous>, transform_indices = @transform_6, window_bounds = array<i64: 6, 128>}, {pipeline_mode = #tpu.pipeline_mode<synchronous>, transform_indices = @transform_7, window_bounds = array<i64: 128, 256>}, {pipeline_mode = #tpu.pipeline_mode<synchronous>, transform_indices = @transform_8, window_bounds = array<i64: 1, 256>}, {pipeline_mode = #tpu.pipeline_mode<synchronous>, transform_indices = @transform_9, window_bounds = array<i64: 256, 128>}, {pipeline_mode = #tpu.pipeline_mode<synchronous>, transform_indices = @transform_10, window_bounds = array<i64: 128, 128>}, {pipeline_mode = #tpu.pipeline_mode<synchronous>, transform_indices = @transform_11, window_bounds = array<i64: 1, 128>}, {transform_indices = @transform_12, window_bounds = array<i64: 2, 128>}]} {
    %c0 = arith.constant 0 : index
    %c0_0 = arith.constant 0 : index
    %0 = vector.load %arg7[%c0, %c0_0] : memref<6x128xf32, #tpu.memory_space<vmem>>, vector<6x128xf32>
    %1 = vector.extract_strided_slice %0 {offsets = [0, 0], sizes = [1, 128], strides = [1, 1]} : vector<6x128xf32> to vector<1x128xf32>
    %2 = vector.extract_strided_slice %0 {offsets = [1, 0], sizes = [1, 128], strides = [1, 1]} : vector<6x128xf32> to vector<1x128xf32>
    %3 = vector.extract_strided_slice %0 {offsets = [2, 0], sizes = [1, 128], strides = [1, 1]} : vector<6x128xf32> to vector<1x128xf32>
    %4 = vector.extract_strided_slice %0 {offsets = [3, 0], sizes = [1, 128], strides = [1, 1]} : vector<6x128xf32> to vector<1x128xf32>
    %5 = vector.extract_strided_slice %0 {offsets = [4, 0], sizes = [1, 128], strides = [1, 1]} : vector<6x128xf32> to vector<1x128xf32>
    %6 = vector.extract_strided_slice %0 {offsets = [5, 0], sizes = [1, 128], strides = [1, 1]} : vector<6x128xf32> to vector<1x128xf32>
    %c0_1 = arith.constant 0 : index
    %c0_2 = arith.constant 0 : index
    %7 = vector.load %arg1[%c0_1, %c0_2] : memref<16x1xi32, #tpu.memory_space<vmem>>, vector<16x1xi32>
    %8 = tpu.iota {dimensions = array<i32: 1>} : vector<16x128xi32>
    %9 = vector.broadcast %7 : vector<16x1xi32> to vector<16x128xi32>
    %10 = arith.cmpi eq, %9, %8 : vector<16x128xi32>
    %11 = arith.extui %10 : vector<16x128xi1> to vector<16x128xi32>
    %12 = arith.sitofp %11 : vector<16x128xi32> to vector<16x128xf32>
    %c0_3 = arith.constant 0 : index
    %c0_4 = arith.constant 0 : index
    %13 = vector.load %arg2[%c0_3, %c0_4] : memref<128x128xf32, #tpu.memory_space<vmem>>, vector<128x128xf32>
    %cst = arith.constant dense<0.000000e+00> : vector<16x128xf32>
    %14 = tpu.matmul %12, %13, %cst {dimension_numbers = #tpu.dot_dimension_numbers<[1], [0], [0], [1], [0, 0, 1, 1], [], []>} : vector<16x128xf32>, vector<128x128xf32>, vector<16x128xf32> -> vector<16x128xf32>
    %15 = vector.shape_cast %14 : vector<16x128xf32> to vector<2x8x128xf32>
    %c0_5 = arith.constant 0 : index
    %c0_6 = arith.constant 0 : index
    %16 = vector.load %arg3[%c0_5, %c0_6] : memref<8x128xf32, #tpu.memory_space<vmem>>, vector<8x128xf32>
    %17 = vector.shape_cast %16 : vector<8x128xf32> to vector<1x8x128xf32>
    %18 = vector.broadcast %17 : vector<1x8x128xf32> to vector<2x8x128xf32>
    %19 = arith.addf %15, %18 : vector<2x8x128xf32>
    %20 = vector.shape_cast %19 : vector<2x8x128xf32> to vector<16x128xf32>
    %21 = arith.truncf %20 : vector<16x128xf32> to vector<16x128xbf16>
    %c0_7 = arith.constant 0 : index
    %c0_8 = arith.constant 0 : index
    %22 = vector.load %arg4[%c0_7, %c0_8] : memref<128x384xbf16, #tpu.memory_space<vmem>>, vector<128x384xbf16>
    %cst_9 = arith.constant dense<0.000000e+00> : vector<16x384xf32>
    %23 = tpu.matmul %21, %22, %cst_9 {dimension_numbers = #tpu.dot_dimension_numbers<[1], [0], [0], [1], [0, 0, 1, 1], [], []>} : vector<16x128xbf16>, vector<128x384xbf16>, vector<16x384xf32> -> vector<16x384xf32>
    %c0_10 = arith.constant 0 : index
    %c0_11 = arith.constant 0 : index
    %24 = vector.load %arg5[%c0_10, %c0_11] : memref<1x384xf32, #tpu.memory_space<vmem>>, vector<1x384xf32>
    %25 = vector.broadcast %24 : vector<1x384xf32> to vector<16x384xf32>
    %26 = arith.addf %23, %25 : vector<16x384xf32>
    %27 = vector.extract_strided_slice %26 {offsets = [0, 0], sizes = [16, 128], strides = [1, 1]} : vector<16x384xf32> to vector<16x128xf32>
    %28 = vector.shape_cast %27 : vector<16x128xf32> to vector<2x8x128xf32>
    %29 = vector.extract_strided_slice %26 {offsets = [0, 128], sizes = [16, 128], strides = [1, 1]} : vector<16x384xf32> to vector<16x128xf32>
    %30 = vector.shape_cast %29 : vector<16x128xf32> to vector<2x8x128xf32>
    %31 = vector.extract_strided_slice %26 {offsets = [0, 256], sizes = [16, 128], strides = [1, 1]} : vector<16x384xf32> to vector<16x128xf32>
    %32 = vector.shape_cast %31 : vector<16x128xf32> to vector<2x8x128xf32>
    %33 = arith.truncf %28 : vector<2x8x128xf32> to vector<2x8x128xbf16>
    %34 = arith.truncf %30 : vector<2x8x128xf32> to vector<2x8x128xbf16>
    %cst_12 = arith.constant dense<0.000000e+00> : vector<2x8x8xf32>
    %35 = tpu.matmul %33, %34, %cst_12 {dimension_numbers = #tpu.dot_dimension_numbers<[2], [2], [1], [1], [0, 0, 0, 1, 1, 1], [0], [0]>} : vector<2x8x128xbf16>, vector<2x8x128xbf16>, vector<2x8x8xf32> -> vector<2x8x8xf32>
    %cst_13 = arith.constant 0.0883883461 : f32
    %36 = vector.broadcast %cst_13 : f32 to vector<2x8x8xf32>
    %37 = arith.mulf %35, %36 : vector<2x8x8xf32>
    %cst_14 = arith.constant dense<0xFF800000> : vector<2x8xf32>
    %38 = vector.multi_reduction <maximumf>, %37, %cst_14 [2] : vector<2x8x8xf32> to vector<2x8xf32>
    %39 = vector.shape_cast %38 : vector<2x8xf32> to vector<2x8x1xf32>
    %40 = vector.broadcast %39 : vector<2x8x1xf32> to vector<2x8x8xf32>
    %41 = arith.subf %37, %40 : vector<2x8x8xf32>
    %42 = math.exp %41 : vector<2x8x8xf32>
    %cst_15 = arith.constant dense<0.000000e+00> : vector<2x8xf32>
    %43 = vector.multi_reduction <add>, %42, %cst_15 [2] : vector<2x8x8xf32> to vector<2x8xf32>
    %44 = vector.shape_cast %43 : vector<2x8xf32> to vector<2x8x1xf32>
    %45 = tpu.reciprocal %44 {approx = true} : vector<2x8x1xf32> -> vector<2x8x1xf32>
    %46 = vector.broadcast %45 : vector<2x8x1xf32> to vector<2x8x8xf32>
    %47 = arith.mulf %42, %46 : vector<2x8x8xf32>
    %48 = arith.truncf %47 : vector<2x8x8xf32> to vector<2x8x8xbf16>
    %49 = arith.truncf %32 : vector<2x8x128xf32> to vector<2x8x128xbf16>
    %cst_16 = arith.constant dense<0.000000e+00> : vector<2x8x128xf32>
    %50 = tpu.matmul %48, %49, %cst_16 {dimension_numbers = #tpu.dot_dimension_numbers<[2], [1], [1], [2], [0, 0, 0, 1, 1, 2], [0], [0]>} : vector<2x8x8xbf16>, vector<2x8x128xbf16>, vector<2x8x128xf32> -> vector<2x8x128xf32>
    %51 = vector.shape_cast %50 : vector<2x8x128xf32> to vector<16x128xf32>
    %52 = arith.truncf %51 : vector<16x128xf32> to vector<16x128xbf16>
    %c0_17 = arith.constant 0 : index
    %c0_18 = arith.constant 0 : index
    %53 = vector.load %arg6[%c0_17, %c0_18] : memref<128x128xbf16, #tpu.memory_space<vmem>>, vector<128x128xbf16>
    %cst_19 = arith.constant dense<0.000000e+00> : vector<16x128xf32>
    %54 = tpu.matmul %52, %53, %cst_19 {dimension_numbers = #tpu.dot_dimension_numbers<[1], [0], [0], [1], [0, 0, 1, 1], [], []>} : vector<16x128xbf16>, vector<128x128xbf16>, vector<16x128xf32> -> vector<16x128xf32>
    %55 = vector.broadcast %1 : vector<1x128xf32> to vector<16x128xf32>
    %56 = arith.addf %54, %55 : vector<16x128xf32>
    %57 = arith.addf %20, %56 : vector<16x128xf32>
    %cst_20 = arith.constant dense<0.000000e+00> : vector<16xf32>
    %58 = vector.multi_reduction <add>, %57, %cst_20 [1] : vector<16x128xf32> to vector<16xf32>
    %59 = vector.shape_cast %58 : vector<16xf32> to vector<16x1xf32>
    %cst_21 = arith.constant 1.280000e+02 : f32
    %60 = vector.broadcast %cst_21 : f32 to vector<16x1xf32>
    %61 = arith.divf %59, %60 : vector<16x1xf32>
    %62 = arith.mulf %57, %57 : vector<16x128xf32>
    %cst_22 = arith.constant dense<0.000000e+00> : vector<16xf32>
    %63 = vector.multi_reduction <add>, %62, %cst_22 [1] : vector<16x128xf32> to vector<16xf32>
    %64 = vector.shape_cast %63 : vector<16xf32> to vector<16x1xf32>
    %cst_23 = arith.constant 1.280000e+02 : f32
    %65 = vector.broadcast %cst_23 : f32 to vector<16x1xf32>
    %66 = arith.divf %64, %65 : vector<16x1xf32>
    %67 = arith.mulf %61, %61 : vector<16x1xf32>
    %68 = arith.subf %66, %67 : vector<16x1xf32>
    %69 = vector.broadcast %61 : vector<16x1xf32> to vector<16x128xf32>
    %70 = arith.subf %57, %69 : vector<16x128xf32>
    %cst_24 = arith.constant 9.99999996E-13 : f32
    %71 = vector.broadcast %cst_24 : f32 to vector<16x1xf32>
    %72 = arith.addf %68, %71 : vector<16x1xf32>
    %73 = math.rsqrt %72 : vector<16x1xf32>
    %74 = vector.broadcast %73 : vector<16x1xf32> to vector<16x128xf32>
    %75 = arith.mulf %70, %74 : vector<16x128xf32>
    %76 = vector.broadcast %2 : vector<1x128xf32> to vector<16x128xf32>
    %77 = arith.mulf %75, %76 : vector<16x128xf32>
    %78 = vector.broadcast %3 : vector<1x128xf32> to vector<16x128xf32>
    %79 = arith.addf %77, %78 : vector<16x128xf32>
    %80 = arith.truncf %79 : vector<16x128xf32> to vector<16x128xbf16>
    %c0_25 = arith.constant 0 : index
    %c0_26 = arith.constant 0 : index
    %81 = vector.load %arg8[%c0_25, %c0_26] : memref<128x256xbf16, #tpu.memory_space<vmem>>, vector<128x256xbf16>
    %cst_27 = arith.constant dense<0.000000e+00> : vector<16x256xf32>
    %82 = tpu.matmul %80, %81, %cst_27 {dimension_numbers = #tpu.dot_dimension_numbers<[1], [0], [0], [1], [0, 0, 1, 1], [], []>} : vector<16x128xbf16>, vector<128x256xbf16>, vector<16x256xf32> -> vector<16x256xf32>
    %c0_28 = arith.constant 0 : index
    %c0_29 = arith.constant 0 : index
    %83 = vector.load %arg9[%c0_28, %c0_29] : memref<1x256xf32, #tpu.memory_space<vmem>>, vector<1x256xf32>
    %84 = vector.broadcast %83 : vector<1x256xf32> to vector<16x256xf32>
    %85 = arith.addf %82, %84 : vector<16x256xf32>
    %cst_30 = arith.constant 5.000000e-01 : f32
    %86 = vector.broadcast %cst_30 : f32 to vector<16x256xf32>
    %87 = arith.mulf %86, %85 : vector<16x256xf32>
    %cst_31 = arith.constant 0.707106769 : f32
    %88 = vector.broadcast %cst_31 : f32 to vector<16x256xf32>
    %89 = arith.mulf %85, %88 : vector<16x256xf32>
    %90 = math.absf %89 : vector<16x256xf32>
    %cst_32 = arith.constant 0.327591091 : f32
    %91 = vector.broadcast %cst_32 : f32 to vector<16x256xf32>
    %92 = arith.mulf %91, %90 : vector<16x256xf32>
    %cst_33 = arith.constant 1.000000e+00 : f32
    %93 = vector.broadcast %cst_33 : f32 to vector<16x256xf32>
    %94 = arith.addf %93, %92 : vector<16x256xf32>
    %95 = tpu.reciprocal %94 {approx = true} : vector<16x256xf32> -> vector<16x256xf32>
    %cst_34 = arith.constant 1.06140542 : f32
    %96 = vector.broadcast %cst_34 : f32 to vector<16x256xf32>
    %97 = arith.mulf %96, %95 : vector<16x256xf32>
    %cst_35 = arith.constant -1.45315206 : f32
    %98 = vector.broadcast %cst_35 : f32 to vector<16x256xf32>
    %99 = arith.addf %97, %98 : vector<16x256xf32>
    %100 = arith.mulf %99, %95 : vector<16x256xf32>
    %cst_36 = arith.constant 1.42141378 : f32
    %101 = vector.broadcast %cst_36 : f32 to vector<16x256xf32>
    %102 = arith.addf %100, %101 : vector<16x256xf32>
    %103 = arith.mulf %102, %95 : vector<16x256xf32>
    %cst_37 = arith.constant -0.284496725 : f32
    %104 = vector.broadcast %cst_37 : f32 to vector<16x256xf32>
    %105 = arith.addf %103, %104 : vector<16x256xf32>
    %106 = arith.mulf %105, %95 : vector<16x256xf32>
    %cst_38 = arith.constant 0.254829586 : f32
    %107 = vector.broadcast %cst_38 : f32 to vector<16x256xf32>
    %108 = arith.addf %106, %107 : vector<16x256xf32>
    %109 = arith.mulf %108, %95 : vector<16x256xf32>
    %cst_39 = arith.constant 0.000000e+00 : f32
    %110 = vector.broadcast %cst_39 : f32 to vector<16x256xf32>
    %111 = arith.subf %110, %90 : vector<16x256xf32>
    %112 = arith.mulf %111, %90 : vector<16x256xf32>
    %113 = math.exp %112 : vector<16x256xf32>
    %114 = arith.mulf %109, %113 : vector<16x256xf32>
    %cst_40 = arith.constant 1.000000e+00 : f32
    %115 = vector.broadcast %cst_40 : f32 to vector<16x256xf32>
    %116 = arith.subf %115, %114 : vector<16x256xf32>
    %cst_41 = arith.constant 0.000000e+00 : f32
    %117 = vector.broadcast %cst_41 : f32 to vector<16x256xf32>
    %118 = arith.cmpf oge, %89, %117 : vector<16x256xf32>
    %cst_42 = arith.constant 0.000000e+00 : f32
    %119 = vector.broadcast %cst_42 : f32 to vector<16x256xf32>
    %120 = arith.subf %119, %116 : vector<16x256xf32>
    %121 = arith.select %118, %116, %120 : vector<16x256xi1>, vector<16x256xf32>
    %cst_43 = arith.constant 1.000000e+00 : f32
    %122 = vector.broadcast %cst_43 : f32 to vector<16x256xf32>
    %123 = arith.addf %122, %121 : vector<16x256xf32>
    %124 = arith.mulf %87, %123 : vector<16x256xf32>
    %125 = arith.truncf %124 : vector<16x256xf32> to vector<16x256xbf16>
    %c0_44 = arith.constant 0 : index
    %c0_45 = arith.constant 0 : index
    %126 = vector.load %arg10[%c0_44, %c0_45] : memref<256x128xbf16, #tpu.memory_space<vmem>>, vector<256x128xbf16>
    %cst_46 = arith.constant dense<0.000000e+00> : vector<16x128xf32>
    %127 = tpu.matmul %125, %126, %cst_46 {dimension_numbers = #tpu.dot_dimension_numbers<[1], [0], [0], [1], [0, 0, 1, 1], [], []>} : vector<16x256xbf16>, vector<256x128xbf16>, vector<16x128xf32> -> vector<16x128xf32>
    %128 = vector.broadcast %4 : vector<1x128xf32> to vector<16x128xf32>
    %129 = arith.addf %127, %128 : vector<16x128xf32>
    %130 = arith.addf %79, %129 : vector<16x128xf32>
    %cst_47 = arith.constant dense<0.000000e+00> : vector<16xf32>
    %131 = vector.multi_reduction <add>, %130, %cst_47 [1] : vector<16x128xf32> to vector<16xf32>
    %132 = vector.shape_cast %131 : vector<16xf32> to vector<16x1xf32>
    %cst_48 = arith.constant 1.280000e+02 : f32
    %133 = vector.broadcast %cst_48 : f32 to vector<16x1xf32>
    %134 = arith.divf %132, %133 : vector<16x1xf32>
    %135 = arith.mulf %130, %130 : vector<16x128xf32>
    %cst_49 = arith.constant dense<0.000000e+00> : vector<16xf32>
    %136 = vector.multi_reduction <add>, %135, %cst_49 [1] : vector<16x128xf32> to vector<16xf32>
    %137 = vector.shape_cast %136 : vector<16xf32> to vector<16x1xf32>
    %cst_50 = arith.constant 1.280000e+02 : f32
    %138 = vector.broadcast %cst_50 : f32 to vector<16x1xf32>
    %139 = arith.divf %137, %138 : vector<16x1xf32>
    %140 = arith.mulf %134, %134 : vector<16x1xf32>
    %141 = arith.subf %139, %140 : vector<16x1xf32>
    %142 = vector.broadcast %134 : vector<16x1xf32> to vector<16x128xf32>
    %143 = arith.subf %130, %142 : vector<16x128xf32>
    %cst_51 = arith.constant 9.99999996E-13 : f32
    %144 = vector.broadcast %cst_51 : f32 to vector<16x1xf32>
    %145 = arith.addf %141, %144 : vector<16x1xf32>
    %146 = math.rsqrt %145 : vector<16x1xf32>
    %147 = vector.broadcast %146 : vector<16x1xf32> to vector<16x128xf32>
    %148 = arith.mulf %143, %147 : vector<16x128xf32>
    %149 = vector.broadcast %5 : vector<1x128xf32> to vector<16x128xf32>
    %150 = arith.mulf %148, %149 : vector<16x128xf32>
    %151 = vector.broadcast %6 : vector<1x128xf32> to vector<16x128xf32>
    %152 = arith.addf %150, %151 : vector<16x128xf32>
    %153 = vector.shape_cast %152 : vector<16x128xf32> to vector<2x8x128xf32>
    %154 = vector.extract_strided_slice %153 {offsets = [0, 0, 0], sizes = [2, 1, 128], strides = [1, 1, 1]} : vector<2x8x128xf32> to vector<2x1x128xf32>
    %155 = vector.shape_cast %154 : vector<2x1x128xf32> to vector<2x128xf32>
    %156 = arith.truncf %155 : vector<2x128xf32> to vector<2x128xbf16>
    %c0_52 = arith.constant 0 : index
    %c0_53 = arith.constant 0 : index
    %157 = vector.load %arg11[%c0_52, %c0_53] : memref<128x128xbf16, #tpu.memory_space<vmem>>, vector<128x128xbf16>
    %cst_54 = arith.constant dense<0.000000e+00> : vector<2x128xf32>
    %158 = tpu.matmul %156, %157, %cst_54 {dimension_numbers = #tpu.dot_dimension_numbers<[1], [0], [0], [1], [0, 0, 1, 1], [], []>} : vector<2x128xbf16>, vector<128x128xbf16>, vector<2x128xf32> -> vector<2x128xf32>
    %c0_55 = arith.constant 0 : index
    %c0_56 = arith.constant 0 : index
    %159 = vector.load %arg12[%c0_55, %c0_56] : memref<1x128xf32, #tpu.memory_space<vmem>>, vector<1x128xf32>
    %160 = vector.broadcast %159 : vector<1x128xf32> to vector<2x128xf32>
    %161 = arith.addf %158, %160 : vector<2x128xf32>
    %c0_57 = arith.constant 0 : index
    %c0_58 = arith.constant 0 : index
    %162 = vector.load %arg13[%c0_57, %c0_58] : memref<2x128xf32, #tpu.memory_space<vmem>>, vector<2x128xf32>
    tpu.vector_store %arg13[%c0_57, %c0_58], %161 {strides = array<i32>} : memref<2x128xf32, #tpu.memory_space<vmem>>, vector<2x128xf32>,
    return
  }
  func.func @transform_0(%arg0: i32) -> (i32, i32) {
    %c0_i32 = arith.constant 0 : i32
    %c0_i32_0 = arith.constant 0 : i32
    return %arg0, %c0_i32 : i32, i32
  }
  func.func @transform_1(%arg0: i32) -> (i32, i32) {
    %c0_i32 = arith.constant 0 : i32
    %c0_i32_0 = arith.constant 0 : i32
    %c0_i32_1 = arith.constant 0 : i32
    return %c0_i32, %c0_i32_0 : i32, i32
  }
  func.func @transform_2(%arg0: i32) -> (i32, i32) {
    %c0_i32 = arith.constant 0 : i32
    %c0_i32_0 = arith.constant 0 : i32
    %c0_i32_1 = arith.constant 0 : i32
    return %c0_i32, %c0_i32_0 : i32, i32
  }
  func.func @transform_3(%arg0: i32) -> (i32, i32) {
    %c0_i32 = arith.constant 0 : i32
    %c0_i32_0 = arith.constant 0 : i32
    %c0_i32_1 = arith.constant 0 : i32
    return %c0_i32, %c0_i32_0 : i32, i32
  }
  func.func @transform_4(%arg0: i32) -> (i32, i32) {
    %c0_i32 = arith.constant 0 : i32
    %c0_i32_0 = arith.constant 0 : i32
    %c0_i32_1 = arith.constant 0 : i32
    return %c0_i32, %c0_i32_0 : i32, i32
  }
  func.func @transform_5(%arg0: i32) -> (i32, i32) {
    %c0_i32 = arith.constant 0 : i32
    %c0_i32_0 = arith.constant 0 : i32
    %c0_i32_1 = arith.constant 0 : i32
    return %c0_i32, %c0_i32_0 : i32, i32
  }
  func.func @transform_6(%arg0: i32) -> (i32, i32) {
    %c0_i32 = arith.constant 0 : i32
    %c0_i32_0 = arith.constant 0 : i32
    %c0_i32_1 = arith.constant 0 : i32
    return %c0_i32, %c0_i32_0 : i32, i32
  }
  func.func @transform_7(%arg0: i32) -> (i32, i32) {
    %c0_i32 = arith.constant 0 : i32
    %c0_i32_0 = arith.constant 0 : i32
    %c0_i32_1 = arith.constant 0 : i32
    return %c0_i32, %c0_i32_0 : i32, i32
  }
  func.func @transform_8(%arg0: i32) -> (i32, i32) {
    %c0_i32 = arith.constant 0 : i32
    %c0_i32_0 = arith.constant 0 : i32
    %c0_i32_1 = arith.constant 0 : i32
    return %c0_i32, %c0_i32_0 : i32, i32
  }
  func.func @transform_9(%arg0: i32) -> (i32, i32) {
    %c0_i32 = arith.constant 0 : i32
    %c0_i32_0 = arith.constant 0 : i32
    %c0_i32_1 = arith.constant 0 : i32
    return %c0_i32, %c0_i32_0 : i32, i32
  }
  func.func @transform_10(%arg0: i32) -> (i32, i32) {
    %c0_i32 = arith.constant 0 : i32
    %c0_i32_0 = arith.constant 0 : i32
    %c0_i32_1 = arith.constant 0 : i32
    return %c0_i32, %c0_i32_0 : i32, i32
  }
  func.func @transform_11(%arg0: i32) -> (i32, i32) {
    %c0_i32 = arith.constant 0 : i32
    %c0_i32_0 = arith.constant 0 : i32
    %c0_i32_1 = arith.constant 0 : i32
    return %c0_i32, %c0_i32_0 : i32, i32
  }
  func.func @transform_12(%arg0: i32) -> (i32, i32) {
    %c0_i32 = arith.constant 0 : i32
    %c0_i32_0 = arith.constant 0 : i32
    return %arg0, %c0_i32 : i32, i32
  }
}

</mosaic_0001>

<llo_original>
// kernel: tpu_custom_call.1
$region0: #{tpu_custom_call.1}
  #allocation0 [shape = 'u32[]', space=smem, size = 0x4, offset = 0x4, fixed_abs, tag = 'smem constant byte address 0x4 - core index']
  #allocation1 [shape = 'u32[144,128]{1,0:T(1,128)}', space=vmem, size = 0x12000, scoped, tag = 'internal scratch']
  %s0 = inlined_call_operand.vmem [shape: s32[16,1], index: 0, kind: input, shape index: {}]
  %s1 = inlined_call_operand.hbm [shape: f32[128,128], index: 1, kind: input, shape index: {}]
  %s2 = inlined_call_operand.vmem [shape: f32[8,128], index: 2, kind: input, shape index: {}]
  %s3 = inlined_call_operand.hbm [shape: bf16[128,384], index: 3, kind: input, shape index: {}]
  %s4 = inlined_call_operand.vmem [shape: f32[1,384], index: 4, kind: input, shape index: {}]
  %s5 = inlined_call_operand.hbm [shape: bf16[128,128], index: 5, kind: input, shape index: {}]
  %s6 = inlined_call_operand.vmem [shape: f32[6,128], index: 6, kind: input, shape index: {}]
  %s7 = inlined_call_operand.hbm [shape: bf16[128,256], index: 7, kind: input, shape index: {}]
  %s8 = inlined_call_operand.vmem [shape: f32[1,256], index: 8, kind: input, shape index: {}]
  %s9 = inlined_call_operand.hbm [shape: bf16[256,128], index: 9, kind: input, shape index: {}]
  %s10 = inlined_call_operand.hbm [shape: bf16[128,128], index: 10, kind: input, shape index: {}]
  %s11 = inlined_call_operand.vmem [shape: f32[1,128], index: 11, kind: input, shape index: {}]
  %s12 = inlined_call_operand.hbm [shape: f32[2,128], index: 12, kind: output, shape index: {}]
  %s13 = sld [smem:[#allocation0]]
  $region82: #{tpu_custom_call.1} parent=0
    _
  %s15 = ssub.s32 1, %s13
  %s16 = scalar_select 0, %s15, %s13
  $region1: #{tpu_custom_call.1} parent=0
    #allocation2 [shape = 'u8[65536]{0}', space=vmem, size = 0x10000, scoped, tag = 'input window, operand 1, single buffered']
    #allocation3 [shape = 's32[1]{0}', space=sflag, size = 0x4, scoped, tag = 'scoped memory for tpu_custom_call.1']
    #allocation4 [shape = 's32[1]{0}', space=sflag, size = 0x4, scoped, tag = 'scoped memory for tpu_custom_call.1']
    #allocation5 [shape = 'u8[98304]{0}', space=vmem, size = 0x18000, scoped, tag = 'input window, operand 3, single buffered']
    #allocation6 [shape = 's32[1]{0}', space=sflag, size = 0x4, scoped, tag = 'scoped memory for tpu_custom_call.1']
    #allocation7 [shape = 'u8[32768]{0}', space=vmem, size = 0x8000, scoped, tag = 'input window, operand 5, single buffered']
    #allocation8 [shape = 'u8[65536]{0}', space=vmem, size = 0x10000, scoped, tag = 'input window, operand 7, single buffered']
    #allocation9 [shape = 's32[1]{0}', space=sflag, size = 0x4, scoped, tag = 'scoped memory for tpu_custom_call.1']
    #allocation10 [shape = 'u8[65536]{0}', space=vmem, size = 0x10000, scoped, tag = 'input window, operand 9, single buffered']
    #allocation11 [shape = 'u8[32768]{0}', space=vmem, size = 0x8000, scoped, tag = 'input window, operand 10, single buffered']
    #allocation12 [shape = 's32[1]{0}', space=sflag, size = 0x4, scoped, tag = 'scoped memory for tpu_custom_call.1']
    #allocation13 [shape = 'u8[1024]{0}', space=vmem, size = 0x400, scoped, tag = 'output window, operand 0, single buffered']
    %17 = vsyncpa [#allocation3], 0
    %18 = vsyncpa [#allocation6], 0
    %19 = vsyncpa [#allocation9], 0
    %20 = vsyncpa [#allocation12], 0
    %21 = vsyncpa [#allocation4], 0
    // Predicated region
    $region2: #{tpu_custom_call.1} parent=1 // pred_check
      _
    $region3: #{tpu_custom_call.1} parent=1 // pred_check_branch
      %23 = sbr.rel (0) target = $region5
    $region4: #{tpu_custom_call.1} parent=1 // pred_region
      _
    $region5: #{tpu_custom_call.1} parent=1 // pred_fallthru
      _
    // Predicated region
    $region6: #{tpu_custom_call.1} parent=1 // pred_check
      _
    $region7: #{tpu_custom_call.1} parent=1 // pred_check_branch
      %25 = sbr.rel (0) target = $region9
    $region8: #{tpu_custom_call.1} parent=1 // pred_region
      %s27 = ssub.s32 2048, 2048
      %28 = vsyncadd [#allocation3], %s27
      %s29 = sshll.u32 [#allocation2], 4
      %s30 = int_to_ptr.vmem [resolvable:$true] %s29
      %35 = dma.hbm_to_vmem [thread:$0]  %s1, 2048, %s30, [#allocation3], 128, 128, 8
    $region9: #{tpu_custom_call.1} parent=1 // pred_fallthru
      _
    // Predicated region
    $region10: #{tpu_custom_call.1} parent=1 // pred_check
      _
    $region11: #{tpu_custom_call.1} parent=1 // pred_check_branch
      %37 = sbr.rel (0) target = $region13
    $region12: #{tpu_custom_call.1} parent=1 // pred_region
      _
    $region13: #{tpu_custom_call.1} parent=1 // pred_fallthru
      _
    // Predicated region
    $region14: #{tpu_custom_call.1} parent=1 // pred_check
      _
    $region15: #{tpu_custom_call.1} parent=1 // pred_check_branch
      %39 = sbr.rel (0) target = $region17
    $region16: #{tpu_custom_call.1} parent=1 // pred_region
      %s41 = ssub.s32 3072, 3072
      %42 = vsyncadd [#allocation6], %s41
      %s43 = sshll.u32 [#allocation5], 4
      %s44 = int_to_ptr.vmem [resolvable:$true] %s43
      %49 = dma.hbm_to_vmem [thread:$0]  %s3, 3072, %s44, [#allocation6], 192, 192, 12
    $region17: #{tpu_custom_call.1} parent=1 // pred_fallthru
      _
    // Predicated region
    $region18: #{tpu_custom_call.1} parent=1 // pred_check
      _
    $region19: #{tpu_custom_call.1} parent=1 // pred_check_branch
      %51 = sbr.rel (0) target = $region21
    $region20: #{tpu_custom_call.1} parent=1 // pred_region
      _
    $region21: #{tpu_custom_call.1} parent=1 // pred_fallthru
      _
    // Predicated region
    $region22: #{tpu_custom_call.1} parent=1 // pred_check
      _
    $region23: #{tpu_custom_call.1} parent=1 // pred_check_branch
      %53 = sbr.rel (0) target = $region25
    $region24: #{tpu_custom_call.1} parent=1 // pred_region
      %s55 = ssub.s32 1024, 1024
      %56 = vsyncadd [#allocation6], %s55
      %s57 = sshll.u32 [#allocation7], 4
      %s58 = int_to_ptr.vmem [resolvable:$true] %s57
      %63 = dma.hbm_to_vmem [thread:$0]  %s5, 1024, %s58, [#allocation6], 64, 64, 4
    $region25: #{tpu_custom_call.1} parent=1 // pred_fallthru
      _
    // Predicated region
    $region26: #{tpu_custom_call.1} parent=1 // pred_check
      _
    $region27: #{tpu_custom_call.1} parent=1 // pred_check_branch
      %65 = sbr.rel (0) target = $region29
    $region28: #{tpu_custom_call.1} parent=1 // pred_region
      _
    $region29: #{tpu_custom_call.1} parent=1 // pred_fallthru
      _
    // Predicated region
    $region30: #{tpu_custom_call.1} parent=1 // pred_check
      _
    $region31: #{tpu_custom_call.1} parent=1 // pred_check_branch
      %67 = sbr.rel (0) target = $region33
    $region32: #{tpu_custom_call.1} parent=1 // pred_region
      %s69 = ssub.s32 2048, 2048
      %70 = vsyncadd [#allocation9], %s69
      %s71 = sshll.u32 [#allocation8], 4
      %s72 = int_to_ptr.vmem [resolvable:$true] %s71
      %77 = dma.hbm_to_vmem [thread:$0]  %s7, 2048, %s72, [#allocation9], 128, 128, 8
    $region33: #{tpu_custom_call.1} parent=1 // pred_fallthru
      _
    // Predicated region
    $region34: #{tpu_custom_call.1} parent=1 // pred_check
      _
    $region35: #{tpu_custom_call.1} parent=1 // pred_check_branch
      %79 = sbr.rel (0) target = $region37
    $region36: #{tpu_custom_call.1} parent=1 // pred_region
      _
    $region37: #{tpu_custom_call.1} parent=1 // pred_fallthru
      _
    // Predicated region
    $region38: #{tpu_custom_call.1} parent=1 // pred_check
      _
    $region39: #{tpu_custom_call.1} parent=1 // pred_check_branch
      %81 = sbr.rel (0) target = $region41
    $region40: #{tpu_custom_call.1} parent=1 // pred_region
      %s83 = ssub.s32 2048, 2048
      %84 = vsyncadd [#allocation9], %s83
      %s85 = sshll.u32 [#allocation10], 4
      %s86 = int_to_ptr.vmem [resolvable:$true] %s85
      %91 = dma.hbm_to_vmem [thread:$0]  %s9, 2048, %s86, [#allocation9], 64, 64, 4
    $region41: #{tpu_custom_call.1} parent=1 // pred_fallthru
      _
    // Predicated region
    $region42: #{tpu_custom_call.1} parent=1 // pred_check
      _
    $region43: #{tpu_custom_call.1} parent=1 // pred_check_branch
      %93 = sbr.rel (0) target = $region45
    $region44: #{tpu_custom_call.1} parent=1 // pred_region
      %s95 = ssub.s32 1024, 1024
      %96 = vsyncadd [#allocation12], %s95
      %s97 = sshll.u32 [#allocation11], 4
      %s98 = int_to_ptr.vmem [resolvable:$true] %s97
      %103 = dma.hbm_to_vmem [thread:$0]  %s10, 1024, %s98, [#allocation12], 64, 64, 4
    $region45: #{tpu_custom_call.1} parent=1 // pred_fallthru
      _
    // Predicated region
    $region46: #{tpu_custom_call.1} parent=1 // pred_check
      _
    $region47: #{tpu_custom_call.1} parent=1 // pred_check_branch
      %105 = sbr.rel (0) target = $region49
    $region48: #{tpu_custom_call.1} parent=1 // pred_region
      _
    $region49: #{tpu_custom_call.1} parent=1 // pred_fallthru
      _
    // Predicated region
    $region50: #{tpu_custom_call.1} parent=1 // pred_check
      _
    $region51: #{tpu_custom_call.1} parent=1 // pred_check_branch
      %107 = sbr.rel (0) target = $region53
    $region52: #{tpu_custom_call.1} parent=1 // pred_region
      %108 = dma.done [#allocation3], 2048
    $region53: #{tpu_custom_call.1} parent=1 // pred_fallthru
      _
    // Predicated region
    $region54: #{tpu_custom_call.1} parent=1 // pred_check
      _
    $region55: #{tpu_custom_call.1} parent=1 // pred_check_branch
      %110 = sbr.rel (0) target = $region57
    $region56: #{tpu_custom_call.1} parent=1 // pred_region
      %111 = dma.done [#allocation6], 3072
    $region57: #{tpu_custom_call.1} parent=1 // pred_fallthru
      _
    // Predicated region
    $region58: #{tpu_custom_call.1} parent=1 // pred_check
      _
    $region59: #{tpu_custom_call.1} parent=1 // pred_check_branch
      %113 = sbr.rel (0) target = $region61
    $region60: #{tpu_custom_call.1} parent=1 // pred_region
      %114 = dma.done [#allocation6], 1024
    $region61: #{tpu_custom_call.1} parent=1 // pred_fallthru
      _
    // Predicated region
    $region62: #{tpu_custom_call.1} parent=1 // pred_check
      _
    $region63: #{tpu_custom_call.1} parent=1 // pred_check_branch
      %116 = sbr.rel (0) target = $region65
    $region64: #{tpu_custom_call.1} parent=1 // pred_region
      %117 = dma.done [#allocation9], 2048
    $region65: #{tpu_custom_call.1} parent=1 // pred_fallthru
      _
    // Predicated region
    $region66: #{tpu_custom_call.1} parent=1 // pred_check
      _
    $region67: #{tpu_custom_call.1} parent=1 // pred_check_branch
      %119 = sbr.rel (0) target = $region69
    $region68: #{tpu_custom_call.1} parent=1 // pred_region
      %120 = dma.done [#allocation9], 2048
    $region69: #{tpu_custom_call.1} parent=1 // pred_fallthru
      _
    // Predicated region
    $region70: #{tpu_custom_call.1} parent=1 // pred_check
      _
    $region71: #{tpu_custom_call.1} parent=1 // pred_check_branch
      %122 = sbr.rel (0) target = $region73
    $region72: #{tpu_custom_call.1} parent=1 // pred_region
      %123 = dma.done [#allocation12], 1024
    $region73: #{tpu_custom_call.1} parent=1 // pred_fallthru
      _
    %v125 = vld [vmem:[%s6] sm:$0x3f]
    %v126 = vld [vmem:[%s0] sm:$0xff]
    %v127 = vld [vmem:[%s0 + $0x8] sm:$0xff]
    %v128 = vlaneseq
    %v129 = vand.u32 %v128, 127
    %130 = vset.pattern.permute.xlu0 0
    %131 = vperm.xlu0 %130, %v126
    %v132 = vpop.permute.xlu0 %131
    %133 = vset.pattern.permute.xlu0 0
    %134 = vperm.xlu0 %133, %v127
    %v135 = vpop.permute.xlu0 %134
    %vm136 = vcmp.eq.s32.totalorder %v132, %v129
    %vm137 = vcmp.eq.s32.totalorder %v135, %v129
    %v138 = vsel %vm136, 1, 0
    %v139 = vsel %vm137, 1, 0
    %v140 = vcvt.s32.f32 %v138
    %v141 = vcvt.s32.f32 %v139
    %v142 = vld [vmem:[#allocation2] sm:$0xff]
    %v143 = vld [vmem:[#allocation2 + $0x8] sm:$0xff]
    %v144 = vld [vmem:[#allocation2 + $0x10] sm:$0xff]
    %v145 = vld [vmem:[#allocation2 + $0x18] sm:$0xff]
    %v146 = vld [vmem:[#allocation2 + $0x20] sm:$0xff]
    %v147 = vld [vmem:[#allocation2 + $0x28] sm:$0xff]
    %v148 = vld [vmem:[#allocation2 + $0x30] sm:$0xff]
    %v149 = vld [vmem:[#allocation2 + $0x38] sm:$0xff]
    %v150 = vld [vmem:[#allocation2 + $0x40] sm:$0xff]
    %v151 = vld [vmem:[#allocation2 + $0x48] sm:$0xff]
    %v152 = vld [vmem:[#allocation2 + $0x50] sm:$0xff]
    %v153 = vld [vmem:[#allocation2 + $0x58] sm:$0xff]
    %v154 = vld [vmem:[#allocation2 + $0x60] sm:$0xff]
    %v155 = vld [vmem:[#allocation2 + $0x68] sm:$0xff]
    %v156 = vld [vmem:[#allocation2 + $0x70] sm:$0xff]
    %v157 = vld [vmem:[#allocation2 + $0x78] sm:$0xff]
    %158 = vmatprep.subr.mxu0 0.0
    %159 = vmatpush1.msra.mxu0 %v157
    %160 = vmatprep.subr.mxu0 0.0
    %161 = vmatpush1.msra.mxu0 %v156
    %162 = vmatprep.subr.mxu0 0.0
    %163 = vmatpush1.msra.mxu0 %v155
    %164 = vmatprep.subr.mxu0 0.0
    %165 = vmatpush1.msra.mxu0 %v154
    %166 = vmatprep.subr.mxu0 0.0
    %167 = vmatpush1.msra.mxu0 %v153
    %168 = vmatprep.subr.mxu0 0.0
    %169 = vmatpush1.msra.mxu0 %v152
    %170 = vmatprep.subr.mxu0 0.0
    %171 = vmatpush1.msra.mxu0 %v151
    %172 = vmatprep.subr.mxu0 0.0
    %173 = vmatpush1.msra.mxu0 %v150
    %174 = vmatprep.subr.mxu0 0.0
    %175 = vmatpush1.msra.mxu0 %v149
    %176 = vmatprep.subr.mxu0 0.0
    %177 = vmatpush1.msra.mxu0 %v148
    %178 = vmatprep.subr.mxu0 0.0
    %179 = vmatpush1.msra.mxu0 %v147
    %180 = vmatprep.subr.mxu0 0.0
    %181 = vmatpush1.msra.mxu0 %v146
    %182 = vmatprep.subr.mxu0 0.0
    %183 = vmatpush1.msra.mxu0 %v145
    %184 = vmatprep.subr.mxu0 0.0
    %185 = vmatpush1.msra.mxu0 %v144
    %186 = vmatprep.subr.mxu0 0.0
    %187 = vmatpush1.msra.mxu0 %v143
    %188 = vmatprep.subr.mxu0 0.0
    %189 = vmatpush1.msra.mxu0 %v142
    %190 = vmatprep.subr.mxu0 0.0
    %191 = vmatpush2.msra.mxu0 0.0
    %192 = vmatprep.subr.mxu0 0.0
    %193 = vmatpush2.msra.mxu0 0.0
    %194 = vmatprep.subr.mxu0 0.0
    %195 = vmatpush2.msra.mxu0 0.0
    %196 = vmatprep.subr.mxu0 0.0
    %197 = vmatpush2.msra.mxu0 0.0
    %198 = vmatprep.subr.mxu0 0.0
    %199 = vmatpush2.msra.mxu0 0.0
    %200 = vmatprep.subr.mxu0 0.0
    %201 = vmatpush2.msra.mxu0 0.0
    %202 = vmatprep.subr.mxu0 0.0
    %203 = vmatpush2.msra.mxu0 0.0
    %204 = vmatprep.subr.mxu0 0.0
    %205 = vmatpush2.msra.mxu0 0.0
    %206 = vmatprep.subr.mxu0 0.0
    %207 = vmatpush2.msra.mxu0 0.0
    %208 = vmatprep.subr.mxu0 0.0
    %209 = vmatpush2.msra.mxu0 0.0
    %210 = vmatprep.subr.mxu0 0.0
    %211 = vmatpush2.msra.mxu0 0.0
    %212 = vmatprep.subr.mxu0 0.0
    %213 = vmatpush2.msra.mxu0 0.0
    %214 = vmatprep.subr.mxu0 0.0
    %215 = vmatpush2.msra.mxu0 0.0
    %216 = vmatprep.subr.mxu0 0.0
    %217 = vmatpush2.msra.mxu0 0.0
    %218 = vmatprep.subr.mxu0 0.0
    %219 = vmatpush2.msra.mxu0 0.0
    %220 = vmatprep.subr.mxu0 0.0
    %221 = vmatpush2.msra.mxu0 0.0
    %222 = vmatprep.mubr.f32.mxu0 0.0
    %223 = vmatmul.mubr.f32.gmra.mxu0 %v140
    %v224 = vpop.f32.mrf.mxu0
    %v225 = vadd.f32 0.0, %v224
    %v226 = vpop.f32.mrf.mxu0
    %227 = vmatprep.mubr.f32.mxu0 0.0
    %228 = vmatmul.mubr.f32.gmra.mxu0 %v141
    %v229 = vpop.f32.mrf.mxu0
    %v230 = vadd.f32 0.0, %v229
    %v231 = vpop.f32.mrf.mxu0
    %232 = vdwg.mxu0
    %v233 = vld [vmem:[%s2] sm:$0xff]
    %v234 = vadd.f32 %v225, %v233
    %v235 = vadd.f32 %v230, %v233
    %v236 = vpack.c.bf16 %v235, %v234
    %v237 = vld [vmem:[#allocation5] sm:$0xff]
    %v238 = vld [vmem:[#allocation5 + $0x8] sm:$0xf]
    %v239 = vld [vmem:[#allocation5 + $0xc] sm:$0xff]
    %v240 = vld [vmem:[#allocation5 + $0x14] sm:$0xf]
    %v241 = vld [vmem:[#allocation5 + $0x18] sm:$0xff]
    %v242 = vld [vmem:[#allocation5 + $0x20] sm:$0xf]
    %v243 = vld [vmem:[#allocation5 + $0x24] sm:$0xff]
    %v244 = vld [vmem:[#allocation5 + $0x2c] sm:$0xf]
    %v245 = vld [vmem:[#allocation5 + $0x30] sm:$0xff]
    %v246 = vld [vmem:[#allocation5 + $0x38] sm:$0xf]
    %v247 = vld [vmem:[#allocation5 + $0x3c] sm:$0xff]
    %v248 = vld [vmem:[#allocation5 + $0x44] sm:$0xf]
    %v249 = vld [vmem:[#allocation5 + $0x48] sm:$0xff]
    %v250 = vld [vmem:[#allocation5 + $0x50] sm:$0xf]
    %v251 = vld [vmem:[#allocation5 + $0x54] sm:$0xff]
    %v252 = vld [vmem:[#allocation5 + $0x5c] sm:$0xf]
    %v253 = vld [vmem:[#allocation5 + $0x60] sm:$0xff]
    %v254 = vld [vmem:[#allocation5 + $0x68] sm:$0xf]
    %v255 = vld [vmem:[#allocation5 + $0x6c] sm:$0xff]
    %v256 = vld [vmem:[#allocation5 + $0x74] sm:$0xf]
    %v257 = vld [vmem:[#allocation5 + $0x78] sm:$0xff]
    %v258 = vld [vmem:[#allocation5 + $0x80] sm:$0xf]
    %v259 = vld [vmem:[#allocation5 + $0x84] sm:$0xff]
    %v260 = vld [vmem:[#allocation5 + $0x8c] sm:$0xf]
    %v261 = vld [vmem:[#allocation5 + $0x90] sm:$0xff]
    %v262 = vld [vmem:[#allocation5 + $0x98] sm:$0xf]
    %v263 = vld [vmem:[#allocation5 + $0x9c] sm:$0xff]
    %v264 = vld [vmem:[#allocation5 + $0xa4] sm:$0xf]
    %v265 = vld [vmem:[#allocation5 + $0xa8] sm:$0xff]
    %v266 = vld [vmem:[#allocation5 + $0xb0] sm:$0xf]
    %v267 = vld [vmem:[#allocation5 + $0xb4] sm:$0xff]
    %v268 = vld [vmem:[#allocation5 + $0xbc] sm:$0xf]
    %v269 = vld [vmem:[%s4] sm:$0x7]
    %v271 = vlaneseq
    %v272 = vshrl.u32 %v271, 7
    %v273 = vsub.s32 0, %v272
    %v274 = vrot.slane %v269, %v273
    %v275 = vlaneseq
    %v276 = vshrl.u32 %v275, 7
    %v277 = vsub.s32 1, %v276
    %v278 = vrot.slane %v269, %v277
    %v279 = vlaneseq
    %v280 = vshrl.u32 %v279, 7
    %v281 = vsub.s32 2, %v280
    %v282 = vrot.slane %v269, %v281
    %v318 = vunpack.c.l.b16 %v237
    %v319 = vunpack.c.h.b16 %v237
    %v320 = vunpack.c.l.b16 %v238
    %v321 = vunpack.c.l.b16 %v239
    %v322 = vunpack.c.h.b16 %v239
    %v323 = vunpack.c.l.b16 %v240
    %v324 = vunpack.c.l.b16 %v241
    %v325 = vunpack.c.h.b16 %v241
    %v326 = vunpack.c.l.b16 %v242
    %v327 = vunpack.c.l.b16 %v243
    %v328 = vunpack.c.h.b16 %v243
    %v329 = vunpack.c.l.b16 %v244
    %v330 = vunpack.c.l.b16 %v245
    %v331 = vunpack.c.h.b16 %v245
    %v332 = vunpack.c.l.b16 %v246
    %v333 = vunpack.c.l.b16 %v247
    %v334 = vunpack.c.h.b16 %v247
    %v335 = vunpack.c.l.b16 %v248
    %v336 = vunpack.c.l.b16 %v249
    %v337 = vunpack.c.h.b16 %v249
    %v338 = vunpack.c.l.b16 %v250
    %v339 = vunpack.c.l.b16 %v251
    %v340 = vunpack.c.h.b16 %v251
    %v341 = vunpack.c.l.b16 %v252
    %v342 = vunpack.c.l.b16 %v253
    %v343 = vunpack.c.h.b16 %v253
    %v344 = vunpack.c.l.b16 %v254
    %v345 = vunpack.c.l.b16 %v255
    %v346 = vunpack.c.h.b16 %v255
    %v347 = vunpack.c.l.b16 %v256
    %v348 = vunpack.c.l.b16 %v257
    %v349 = vunpack.c.h.b16 %v257
    %v350 = vunpack.c.l.b16 %v258
    %v351 = vunpack.c.l.b16 %v259
    %v352 = vunpack.c.h.b16 %v259
    %v353 = vunpack.c.l.b16 %v260
    %v354 = vunpack.c.l.b16 %v261
    %v355 = vunpack.c.h.b16 %v261
    %v356 = vunpack.c.l.b16 %v262
    %v357 = vunpack.c.l.b16 %v263
    %v358 = vunpack.c.h.b16 %v263
    %v359 = vunpack.c.l.b16 %v264
    %v360 = vunpack.c.l.b16 %v265
    %v361 = vunpack.c.h.b16 %v265
    %v362 = vunpack.c.l.b16 %v266
    %v363 = vunpack.c.l.b16 %v267
    %v364 = vunpack.c.h.b16 %v267
    %v365 = vunpack.c.l.b16 %v268
    %v366 = vpack.c.b16 %v321, %v318
    %v367 = vpack.c.b16 %v322, %v319
    %v368 = vpack.c.b16 %v323, %v320
    %v369 = vpack.c.b16 %v327, %v324
    %v370 = vpack.c.b16 %v328, %v325
    %v371 = vpack.c.b16 %v329, %v326
    %v372 = vpack.c.b16 %v333, %v330
    %v373 = vpack.c.b16 %v334, %v331
    %v374 = vpack.c.b16 %v335, %v332
    %v375 = vpack.c.b16 %v339, %v336
    %v376 = vpack.c.b16 %v340, %v337
    %v377 = vpack.c.b16 %v341, %v338
    %v378 = vpack.c.b16 %v345, %v342
    %v379 = vpack.c.b16 %v346, %v343
    %v380 = vpack.c.b16 %v347, %v344
    %v381 = vpack.c.b16 %v351, %v348
    %v382 = vpack.c.b16 %v352, %v349
    %v383 = vpack.c.b16 %v353, %v350
    %v384 = vpack.c.b16 %v357, %v354
    %v385 = vpack.c.b16 %v358, %v355
    %v386 = vpack.c.b16 %v359, %v356
    %v387 = vpack.c.b16 %v363, %v360
    %v388 = vpack.c.b16 %v364, %v361
    %v389 = vpack.c.b16 %v365, %v362
    %414 = vmatprep.subr.bf16.mxu0 %v388
    %415 = vmatpush1.bf16.msra.mxu0 %v387
    %416 = vmatprep.subr.bf16.mxu0 %v385
    %417 = vmatpush1.bf16.msra.mxu0 %v384
    %418 = vmatprep.subr.bf16.mxu0 %v382
    %419 = vmatpush1.bf16.msra.mxu0 %v381
    %420 = vmatprep.subr.bf16.mxu0 %v379
    %421 = vmatpush1.bf16.msra.mxu0 %v378
    %422 = vmatprep.subr.bf16.mxu0 %v376
    %423 = vmatpush1.bf16.msra.mxu0 %v375
    %424 = vmatprep.subr.bf16.mxu0 %v373
    %425 = vmatpush1.bf16.msra.mxu0 %v372
    %426 = vmatprep.subr.bf16.mxu0 %v370
    %427 = vmatpush1.bf16.msra.mxu0 %v369
    %428 = vmatprep.subr.bf16.mxu0 %v367
    %429 = vmatpush1.bf16.msra.mxu0 %v366
    %430 = vmatprep.subr.bf16.mxu0 0
    %431 = vmatpush2.bf16.msra.mxu0 0
    %432 = vmatprep.subr.bf16.mxu0 0
    %433 = vmatpush2.bf16.msra.mxu0 0
    %434 = vmatprep.subr.bf16.mxu0 0
    %435 = vmatpush2.bf16.msra.mxu0 0
    %436 = vmatprep.subr.bf16.mxu0 0
    %437 = vmatpush2.bf16.msra.mxu0 0
    %438 = vmatprep.subr.bf16.mxu0 0
    %439 = vmatpush2.bf16.msra.mxu0 0
    %440 = vmatprep.subr.bf16.mxu0 0
    %441 = vmatpush2.bf16.msra.mxu0 0
    %442 = vmatprep.subr.bf16.mxu0 0
    %443 = vmatpush2.bf16.msra.mxu0 0
    %444 = vmatprep.subr.bf16.mxu0 0
    %445 = vmatpush2.bf16.msra.mxu0 0
    %446 = vmatprep.mubr.bf16.mxu0 0
    %447 = vmatmul.mubr.bf16.gmra.mxu0 %v236
    %v448 = vpop.f32.mrf.mxu0
    %v449 = vadd.f32 %v274, %v448
    %v450 = vpop.f32.mrf.mxu0
    %v451 = vadd.f32 %v278, %v450
    %v452 = vpop.f32.mrf.mxu0
    %v453 = vadd.f32 %v274, %v452
    %v454 = vpop.f32.mrf.mxu0
    %v455 = vadd.f32 %v278, %v454
    %456 = vdwg.mxu0
    %457 = vmatprep.subr.bf16.mxu0 0
    %458 = vmatpush1.bf16.msra.mxu0 %v389
    %459 = vmatprep.subr.bf16.mxu0 0
    %460 = vmatpush1.bf16.msra.mxu0 %v386
    %461 = vmatprep.subr.bf16.mxu0 0
    %462 = vmatpush1.bf16.msra.mxu0 %v383
    %463 = vmatprep.subr.bf16.mxu0 0
    %464 = vmatpush1.bf16.msra.mxu0 %v380
    %465 = vmatprep.subr.bf16.mxu0 0
    %466 = vmatpush1.bf16.msra.mxu0 %v377
    %467 = vmatprep.subr.bf16.mxu0 0
    %468 = vmatpush1.bf16.msra.mxu0 %v374
    %469 = vmatprep.subr.bf16.mxu0 0
    %470 = vmatpush1.bf16.msra.mxu0 %v371
    %471 = vmatprep.subr.bf16.mxu0 0
    %472 = vmatpush1.bf16.msra.mxu0 %v368
    %473 = vmatprep.subr.bf16.mxu0 0
    %474 = vmatpush2.bf16.msra.mxu0 0
    %475 = vmatprep.subr.bf16.mxu0 0
    %476 = vmatpush2.bf16.msra.mxu0 0
    %477 = vmatprep.subr.bf16.mxu0 0
    %478 = vmatpush2.bf16.msra.mxu0 0
    %479 = vmatprep.subr.bf16.mxu0 0
    %480 = vmatpush2.bf16.msra.mxu0 0
    %481 = vmatprep.subr.bf16.mxu0 0
    %482 = vmatpush2.bf16.msra.mxu0 0
    %483 = vmatprep.subr.bf16.mxu0 0
    %484 = vmatpush2.bf16.msra.mxu0 0
    %485 = vmatprep.subr.bf16.mxu0 0
    %486 = vmatpush2.bf16.msra.mxu0 0
    %487 = vmatprep.subr.bf16.mxu0 0
    %488 = vmatpush2.bf16.msra.mxu0 0
    %489 = vmatprep.mubr.bf16.mxu0 0
    %490 = vmatmul.mubr.bf16.gmra.mxu0 %v236
    %v491 = vpop.f32.mrf.mxu0
    %v492 = vadd.f32 %v282, %v491
    %v493 = vpop.f32.mrf.mxu0
    %v494 = vpop.f32.mrf.mxu0
    %v495 = vadd.f32 %v282, %v494
    %v496 = vpop.f32.mrf.mxu0
    %497 = vdwg.mxu0
    %v498 = vpack.c.bf16 %v449, %v449
    %v499 = vpack.c.bf16 %v453, %v453
    %v500 = vpack.c.bf16 %v451, %v451
    %v501 = vpack.c.bf16 %v455, %v455
    %502 = vmatprep.subr.bf16.mxu0 0
    %503 = vmatpush1.bf16.xpose.msra.mxu0 0
    %504 = vmatprep.subr.bf16.mxu0 0
    %505 = vmatpush1.bf16.xpose.msra.mxu0 0
    %506 = vmatprep.subr.bf16.mxu0 0
    %507 = vmatpush1.bf16.xpose.msra.mxu0 0
    %508 = vmatprep.subr.bf16.mxu0 0
    %509 = vmatpush1.bf16.xpose.msra.mxu0 0
    %510 = vmatprep.subr.bf16.mxu0 0
    %511 = vmatpush1.bf16.xpose.msra.mxu0 0
    %512 = vmatprep.subr.bf16.mxu0 0
    %513 = vmatpush1.bf16.xpose.msra.mxu0 0
    %514 = vmatprep.subr.bf16.mxu0 0
    %515 = vmatpush1.bf16.xpose.msra.mxu0 0
    %516 = vmatprep.subr.bf16.mxu0 0
    %517 = vmatpush1.bf16.xpose.msra.mxu0 %v500
    %518 = vmatprep.subr.bf16.mxu0 0
    %519 = vmatpush2.bf16.xpose.msra.mxu0 0
    %520 = vmatprep.subr.bf16.mxu0 0
    %521 = vmatpush2.bf16.xpose.msra.mxu0 0
    %522 = vmatprep.subr.bf16.mxu0 0
    %523 = vmatpush2.bf16.xpose.msra.mxu0 0
    %524 = vmatprep.subr.bf16.mxu0 0
    %525 = vmatpush2.bf16.xpose.msra.mxu0 0
    %526 = vmatprep.subr.bf16.mxu0 0
    %527 = vmatpush2.bf16.xpose.msra.mxu0 0
    %528 = vmatprep.subr.bf16.mxu0 0
    %529 = vmatpush2.bf16.xpose.msra.mxu0 0
    %530 = vmatprep.subr.bf16.mxu0 0
    %531 = vmatpush2.bf16.xpose.msra.mxu0 0
    %532 = vmatprep.subr.bf16.mxu0 0
    %533 = vmatpush2.bf16.xpose.msra.mxu0 0
    %534 = vmatprep.mubr.bf16.mxu0 0
    %535 = vmatmul.mubr.bf16.gmra.mxu0 %v498
    %v536 = vpop.f32.mrf.mxu0
    %v537 = vadd.f32 0.0, %v536
    %v538 = vpop.f32.mrf.mxu0
    %v539 = vpop.f32.mrf.mxu0
    %v540 = vpop.f32.mrf.mxu0
    %541 = vdwg.mxu0
    %542 = vmatprep.subr.bf16.mxu0 0
    %543 = vmatpush1.bf16.xpose.msra.mxu0 0
    %544 = vmatprep.subr.bf16.mxu0 0
    %545 = vmatpush1.bf16.xpose.msra.mxu0 0
    %546 = vmatprep.subr.bf16.mxu0 0
    %547 = vmatpush1.bf16.xpose.msra.mxu0 0
    %548 = vmatprep.subr.bf16.mxu0 0
    %549 = vmatpush1.bf16.xpose.msra.mxu0 0
    %550 = vmatprep.subr.bf16.mxu0 0
    %551 = vmatpush1.bf16.xpose.msra.mxu0 0
    %552 = vmatprep.subr.bf16.mxu0 0
    %553 = vmatpush1.bf16.xpose.msra.mxu0 0
    %554 = vmatprep.subr.bf16.mxu0 0
    %555 = vmatpush1.bf16.xpose.msra.mxu0 0
    %556 = vmatprep.subr.bf16.mxu0 0
    %557 = vmatpush1.bf16.xpose.msra.mxu0 %v501
    %558 = vmatprep.subr.bf16.mxu0 0
    %559 = vmatpush2.bf16.xpose.msra.mxu0 0
    %560 = vmatprep.subr.bf16.mxu0 0
    %561 = vmatpush2.bf16.xpose.msra.mxu0 0
    %562 = vmatprep.subr.bf16.mxu0 0
    %563 = vmatpush2.bf16.xpose.msra.mxu0 0
    %564 = vmatprep.subr.bf16.mxu0 0
    %565 = vmatpush2.bf16.xpose.msra.mxu0 0
    %566 = vmatprep.subr.bf16.mxu0 0
    %567 = vmatpush2.bf16.xpose.msra.mxu0 0
    %568 = vmatprep.subr.bf16.mxu0 0
    %569 = vmatpush2.bf16.xpose.msra.mxu0 0
    %570 = vmatprep.subr.bf16.mxu0 0
    %571 = vmatpush2.bf16.xpose.msra.mxu0 0
    %572 = vmatprep.subr.bf16.mxu0 0
    %573 = vmatpush2.bf16.xpose.msra.mxu0 0
    %574 = vmatprep.mubr.bf16.mxu0 0
    %575 = vmatmul.mubr.bf16.gmra.mxu0 %v499
    %v576 = vpop.f32.mrf.mxu0
    %v577 = vadd.f32 0.0, %v576
    %v578 = vpop.f32.mrf.mxu0
    %v579 = vpop.f32.mrf.mxu0
    %v580 = vpop.f32.mrf.mxu0
    %581 = vdwg.mxu0
    %v582 = vmul.f32 %v537, 0.088388346
    %v583 = vmul.f32 %v577, 0.088388346
    %vm584 = vcmask 64512
    %v585 = vsel %vm584, %v582, -inf
    %586 = vmax.xlane.f32.xlu0 %v585
    %v587 = vpop.xlane.xlu0 %586
    %v588 = vsel %vm584, %v583, -inf
    %589 = vmax.xlane.f32.xlu0 %v588
    %v590 = vpop.xlane.xlu0 %589
    %v591 = vsub.f32 %v582, %v587
    %v592 = vsub.f32 %v583, %v590
    %v593 = vmul.f32 %v591, 1.442695
    %v594 = vpow.pop %v593
    %v595 = vmul.f32 %v592, 1.442695
    %v596 = vpow.pop %v595
    %v597 = vsel %vm584, %v594, 0.0
    %598 = vadd.xlane.f32.xlu0 %v597
    %v599 = vpop.xlane.xlu0 %598
    %v600 = vsel %vm584, %v596, 0.0
    %601 = vadd.xlane.f32.xlu0 %v600
    %v602 = vpop.xlane.xlu0 %601
    %v603 = vrcp.pop %v599
    %v604 = vrcp.pop %v602
    %v605 = vmul.f32 %v594, %v603
    %v606 = vmul.f32 %v596, %v604
    %v607 = vpack.c.bf16 %v605, %v605
    %v608 = vpack.c.bf16 %v606, %v606
    %v609 = vpack.c.bf16 %v492, %v492
    %v610 = vpack.c.bf16 %v495, %v495
    %v612 = vsel %vm584, %v607, 0
    %vm614 = vcmask 1043456
    %v616 = vsel %vm614, %v609, 0
    %618 = vmatprep.subr.bf16.mxu0 0
    %619 = vmatpush1.bf16.msra.mxu0 0
    %620 = vmatprep.subr.bf16.mxu0 0
    %621 = vmatpush1.bf16.msra.mxu0 0
    %622 = vmatprep.subr.bf16.mxu0 0
    %623 = vmatpush1.bf16.msra.mxu0 0
    %624 = vmatprep.subr.bf16.mxu0 0
    %625 = vmatpush1.bf16.msra.mxu0 0
    %626 = vmatprep.subr.bf16.mxu0 0
    %627 = vmatpush1.bf16.msra.mxu0 0
    %628 = vmatprep.subr.bf16.mxu0 0
    %629 = vmatpush1.bf16.msra.mxu0 0
    %630 = vmatprep.subr.bf16.mxu0 0
    %631 = vmatpush1.bf16.msra.mxu0 0
    %632 = vmatprep.subr.bf16.mxu0 0
    %633 = vmatpush1.bf16.msra.mxu0 %v616
    %634 = vmatprep.subr.bf16.mxu0 0
    %635 = vmatpush2.bf16.msra.mxu0 0
    %636 = vmatprep.subr.bf16.mxu0 0
    %637 = vmatpush2.bf16.msra.mxu0 0
    %638 = vmatprep.subr.bf16.mxu0 0
    %639 = vmatpush2.bf16.msra.mxu0 0
    %640 = vmatprep.subr.bf16.mxu0 0
    %641 = vmatpush2.bf16.msra.mxu0 0
    %642 = vmatprep.subr.bf16.mxu0 0
    %643 = vmatpush2.bf16.msra.mxu0 0
    %644 = vmatprep.subr.bf16.mxu0 0
    %645 = vmatpush2.bf16.msra.mxu0 0
    %646 = vmatprep.subr.bf16.mxu0 0
    %647 = vmatpush2.bf16.msra.mxu0 0
    %648 = vmatprep.subr.bf16.mxu0 0
    %649 = vmatpush2.bf16.msra.mxu0 0
    %650 = vmatprep.mubr.bf16.mxu0 0
    %651 = vmatmul.mubr.bf16.gmra.mxu0 %v612
    %v652 = vpop.f32.mrf.mxu0
    %v653 = vadd.f32 0.0, %v652
    %v654 = vpop.f32.mrf.mxu0
    %v655 = vpop.f32.mrf.mxu0
    %v656 = vpop.f32.mrf.mxu0
    %657 = vdwg.mxu0
    %v659 = vsel %vm584, %v608, 0
    %v662 = vsel %vm614, %v610, 0
    %664 = vmatprep.subr.bf16.mxu0 0
    %665 = vmatpush1.bf16.msra.mxu0 0
    %666 = vmatprep.subr.bf16.mxu0 0
    %667 = vmatpush1.bf16.msra.mxu0 0
    %668 = vmatprep.subr.bf16.mxu0 0
    %669 = vmatpush1.bf16.msra.mxu0 0
    %670 = vmatprep.subr.bf16.mxu0 0
    %671 = vmatpush1.bf16.msra.mxu0 0
    %672 = vmatprep.subr.bf16.mxu0 0
    %673 = vmatpush1.bf16.msra.mxu0 0
    %674 = vmatprep.subr.bf16.mxu0 0
    %675 = vmatpush1.bf16.msra.mxu0 0
    %676 = vmatprep.subr.bf16.mxu0 0
    %677 = vmatpush1.bf16.msra.mxu0 0
    %678 = vmatprep.subr.bf16.mxu0 0
    %679 = vmatpush1.bf16.msra.mxu0 %v662
    %680 = vmatprep.subr.bf16.mxu0 0
    %681 = vmatpush2.bf16.msra.mxu0 0
    %682 = vmatprep.subr.bf16.mxu0 0
    %683 = vmatpush2.bf16.msra.mxu0 0
    %684 = vmatprep.subr.bf16.mxu0 0
    %685 = vmatpush2.bf16.msra.mxu0 0
    %686 = vmatprep.subr.bf16.mxu0 0
    %687 = vmatpush2.bf16.msra.mxu0 0
    %688 = vmatprep.subr.bf16.mxu0 0
    %689 = vmatpush2.bf16.msra.mxu0 0
    %690 = vmatprep.subr.bf16.mxu0 0
    %691 = vmatpush2.bf16.msra.mxu0 0
    %692 = vmatprep.subr.bf16.mxu0 0
    %693 = vmatpush2.bf16.msra.mxu0 0
    %694 = vmatprep.subr.bf16.mxu0 0
    %695 = vmatpush2.bf16.msra.mxu0 0
    %696 = vmatprep.mubr.bf16.mxu0 0
    %697 = vmatmul.mubr.bf16.gmra.mxu0 %v659
    %v698 = vpop.f32.mrf.mxu0
    %v699 = vadd.f32 0.0, %v698
    %v700 = vpop.f32.mrf.mxu0
    %v701 = vpop.f32.mrf.mxu0
    %v702 = vpop.f32.mrf.mxu0
    %703 = vdwg.mxu0
    %v704 = vpack.c.bf16 %v699, %v653
    %v705 = vld [vmem:[#allocation7] sm:$0xf]
    %v706 = vld [vmem:[#allocation7 + $0x4] sm:$0xf]
    %v707 = vld [vmem:[#allocation7 + $0x8] sm:$0xf]
    %v708 = vld [vmem:[#allocation7 + $0xc] sm:$0xf]
    %v709 = vld [vmem:[#allocation7 + $0x10] sm:$0xf]
    %v710 = vld [vmem:[#allocation7 + $0x14] sm:$0xf]
    %v711 = vld [vmem:[#allocation7 + $0x18] sm:$0xf]
    %v712 = vld [vmem:[#allocation7 + $0x1c] sm:$0xf]
    %v713 = vld [vmem:[#allocation7 + $0x20] sm:$0xf]
    %v714 = vld [vmem:[#allocation7 + $0x24] sm:$0xf]
    %v715 = vld [vmem:[#allocation7 + $0x28] sm:$0xf]
    %v716 = vld [vmem:[#allocation7 + $0x2c] sm:$0xf]
    %v717 = vld [vmem:[#allocation7 + $0x30] sm:$0xf]
    %v718 = vld [vmem:[#allocation7 + $0x34] sm:$0xf]
    %v719 = vld [vmem:[#allocation7 + $0x38] sm:$0xf]
    %v720 = vld [vmem:[#allocation7 + $0x3c] sm:$0xf]
    %v721 = vlaneseq
    %v722 = vshrl.u32 %v721, 7
    %v723 = vsub.s32 0, %v722
    %v724 = vrot.slane %v125, %v723
    %v741 = vunpack.c.l.b16 %v705
    %v742 = vunpack.c.l.b16 %v706
    %v743 = vunpack.c.l.b16 %v707
    %v744 = vunpack.c.l.b16 %v708
    %v745 = vunpack.c.l.b16 %v709
    %v746 = vunpack.c.l.b16 %v710
    %v747 = vunpack.c.l.b16 %v711
    %v748 = vunpack.c.l.b16 %v712
    %v749 = vunpack.c.l.b16 %v713
    %v750 = vunpack.c.l.b16 %v714
    %v751 = vunpack.c.l.b16 %v715
    %v752 = vunpack.c.l.b16 %v716
    %v753 = vunpack.c.l.b16 %v717
    %v754 = vunpack.c.l.b16 %v718
    %v755 = vunpack.c.l.b16 %v719
    %v756 = vunpack.c.l.b16 %v720
    %v757 = vpack.c.b16 %v742, %v741
    %v758 = vpack.c.b16 %v744, %v743
    %v759 = vpack.c.b16 %v746, %v745
    %v760 = vpack.c.b16 %v748, %v747
    %v761 = vpack.c.b16 %v750, %v749
    %v762 = vpack.c.b16 %v752, %v751
    %v763 = vpack.c.b16 %v754, %v753
    %v764 = vpack.c.b16 %v756, %v755
    %773 = vmatprep.subr.bf16.mxu0 0
    %774 = vmatpush1.bf16.msra.mxu0 %v764
    %775 = vmatprep.subr.bf16.mxu0 0
    %776 = vmatpush1.bf16.msra.mxu0 %v763
    %777 = vmatprep.subr.bf16.mxu0 0
    %778 = vmatpush1.bf16.msra.mxu0 %v762
    %779 = vmatprep.subr.bf16.mxu0 0
    %780 = vmatpush1.bf16.msra.mxu0 %v761
    %781 = vmatprep.subr.bf16.mxu0 0
    %782 = vmatpush1.bf16.msra.mxu0 %v760
    %783 = vmatprep.subr.bf16.mxu0 0
    %784 = vmatpush1.bf16.msra.mxu0 %v759
    %785 = vmatprep.subr.bf16.mxu0 0
    %786 = vmatpush1.bf16.msra.mxu0 %v758
    %787 = vmatprep.subr.bf16.mxu0 0
    %788 = vmatpush1.bf16.msra.mxu0 %v757
    %789 = vmatprep.subr.bf16.mxu0 0
    %790 = vmatpush2.bf16.msra.mxu0 0
    %791 = vmatprep.subr.bf16.mxu0 0
    %792 = vmatpush2.bf16.msra.mxu0 0
    %793 = vmatprep.subr.bf16.mxu0 0
    %794 = vmatpush2.bf16.msra.mxu0 0
    %795 = vmatprep.subr.bf16.mxu0 0
    %796 = vmatpush2.bf16.msra.mxu0 0
    %797 = vmatprep.subr.bf16.mxu0 0
    %798 = vmatpush2.bf16.msra.mxu0 0
    %799 = vmatprep.subr.bf16.mxu0 0
    %800 = vmatpush2.bf16.msra.mxu0 0
    %801 = vmatprep.subr.bf16.mxu0 0
    %802 = vmatpush2.bf16.msra.mxu0 0
    %803 = vmatprep.subr.bf16.mxu0 0
    %804 = vmatpush2.bf16.msra.mxu0 0
    %805 = vmatprep.mubr.bf16.mxu0 0
    %806 = vmatmul.mubr.bf16.gmra.mxu0 %v704
    %v807 = vpop.f32.mrf.mxu0
    %v808 = vadd.f32 %v724, %v807
    %v809 = vpop.f32.mrf.mxu0
    %v810 = vpop.f32.mrf.mxu0
    %v811 = vadd.f32 %v724, %v810
    %v812 = vpop.f32.mrf.mxu0
    %813 = vdwg.mxu0
    %v814 = vadd.f32 %v234, %v808
    %v815 = vadd.f32 %v235, %v811
    %816 = vadd.xlane.f32.xlu0 %v814
    %v817 = vpop.xlane.xlu0 %816
    %818 = vadd.xlane.f32.xlu0 %v815
    %v819 = vpop.xlane.xlu0 %818
    %v820 = vrcp.pop 128.0
    %v821 = vmul.f32 %v817, %v820
    %v822 = vmul.f32 %v819, %v820
    %v823 = vmul.f32 %v814, %v814
    %v824 = vmul.f32 %v815, %v815
    %825 = vadd.xlane.f32.xlu0 %v823
    %v826 = vpop.xlane.xlu0 %825
    %827 = vadd.xlane.f32.xlu0 %v824
    %v828 = vpop.xlane.xlu0 %827
    %v829 = vmul.f32 %v826, %v820
    %v830 = vmul.f32 %v828, %v820
    %v831 = vmul.f32 %v821, %v821
    %v832 = vmul.f32 %v822, %v822
    %v833 = vsub.f32 %v829, %v831
    %v834 = vsub.f32 %v830, %v832
    %v835 = vsub.f32 %v814, %v821
    %v836 = vsub.f32 %v815, %v822
    %v837 = vadd.f32 %v833, 1e-12
    %v838 = vadd.f32 %v834, 1e-12
    %v839 = vrsqrt.pop %v837
    %v840 = vrsqrt.pop %v838
    %v841 = vmul.f32 %v835, %v839
    %v842 = vmul.f32 %v836, %v840
    %v843 = vlaneseq
    %v844 = vshrl.u32 %v843, 7
    %v845 = vsub.s32 1, %v844
    %v846 = vrot.slane %v125, %v845
    %v847 = vmul.f32 %v841, %v846
    %v848 = vmul.f32 %v842, %v846
    %v849 = vlaneseq
    %v850 = vshrl.u32 %v849, 7
    %v851 = vsub.s32 2, %v850
    %v852 = vrot.slane %v125, %v851
    %v853 = vadd.f32 %v847, %v852
    %v854 = vadd.f32 %v848, %v852
    %v855 = vpack.c.bf16 %v854, %v853
    %v856 = vld [vmem:[#allocation8] sm:$0xff]
    %v857 = vld [vmem:[#allocation8 + $0x8] sm:$0xff]
    %v858 = vld [vmem:[#allocation8 + $0x10] sm:$0xff]
    %v859 = vld [vmem:[#allocation8 + $0x18] sm:$0xff]
    %v860 = vld [vmem:[#allocation8 + $0x20] sm:$0xff]
    %v861 = vld [vmem:[#allocation8 + $0x28] sm:$0xff]
    %v862 = vld [vmem:[#allocation8 + $0x30] sm:$0xff]
    %v863 = vld [vmem:[#allocation8 + $0x38] sm:$0xff]
    %v864 = vld [vmem:[#allocation8 + $0x40] sm:$0xff]
    %v865 = vld [vmem:[#allocation8 + $0x48] sm:$0xff]
    %v866 = vld [vmem:[#allocation8 + $0x50] sm:$0xff]
    %v867 = vld [vmem:[#allocation8 + $0x58] sm:$0xff]
    %v868 = vld [vmem:[#allocation8 + $0x60] sm:$0xff]
    %v869 = vld [vmem:[#allocation8 + $0x68] sm:$0xff]
    %v870 = vld [vmem:[#allocation8 + $0x70] sm:$0xff]
    %v871 = vld [vmem:[#allocation8 + $0x78] sm:$0xff]
    %v872 = vld [vmem:[%s8] sm:$0x3]
    %v874 = vlaneseq
    %v875 = vshrl.u32 %v874, 7
    %v876 = vsub.s32 0, %v875
    %v877 = vrot.slane %v872, %v876
    %v878 = vlaneseq
    %v879 = vshrl.u32 %v878, 7
    %v880 = vsub.s32 1, %v879
    %v881 = vrot.slane %v872, %v880
    %v900 = vunpack.c.l.b16 %v856
    %v901 = vunpack.c.h.b16 %v856
    %v902 = vunpack.c.l.b16 %v857
    %v903 = vunpack.c.h.b16 %v857
    %v904 = vunpack.c.l.b16 %v858
    %v905 = vunpack.c.h.b16 %v858
    %v906 = vunpack.c.l.b16 %v859
    %v907 = vunpack.c.h.b16 %v859
    %v908 = vunpack.c.l.b16 %v860
    %v909 = vunpack.c.h.b16 %v860
    %v910 = vunpack.c.l.b16 %v861
    %v911 = vunpack.c.h.b16 %v861
    %v912 = vunpack.c.l.b16 %v862
    %v913 = vunpack.c.h.b16 %v862
    %v914 = vunpack.c.l.b16 %v863
    %v915 = vunpack.c.h.b16 %v863
    %v916 = vunpack.c.l.b16 %v864
    %v917 = vunpack.c.h.b16 %v864
    %v918 = vunpack.c.l.b16 %v865
    %v919 = vunpack.c.h.b16 %v865
    %v920 = vunpack.c.l.b16 %v866
    %v921 = vunpack.c.h.b16 %v866
    %v922 = vunpack.c.l.b16 %v867
    %v923 = vunpack.c.h.b16 %v867
    %v924 = vunpack.c.l.b16 %v868
    %v925 = vunpack.c.h.b16 %v868
    %v926 = vunpack.c.l.b16 %v869
    %v927 = vunpack.c.h.b16 %v869
    %v928 = vunpack.c.l.b16 %v870
    %v929 = vunpack.c.h.b16 %v870
    %v930 = vunpack.c.l.b16 %v871
    %v931 = vunpack.c.h.b16 %v871
    %v932 = vpack.c.b16 %v902, %v900
    %v933 = vpack.c.b16 %v903, %v901
    %v934 = vpack.c.b16 %v906, %v904
    %v935 = vpack.c.b16 %v907, %v905
    %v936 = vpack.c.b16 %v910, %v908
    %v937 = vpack.c.b16 %v911, %v909
    %v938 = vpack.c.b16 %v914, %v912
    %v939 = vpack.c.b16 %v915, %v913
    %v940 = vpack.c.b16 %v918, %v916
    %v941 = vpack.c.b16 %v919, %v917
    %v942 = vpack.c.b16 %v922, %v920
    %v943 = vpack.c.b16 %v923, %v921
    %v944 = vpack.c.b16 %v926, %v924
    %v945 = vpack.c.b16 %v927, %v925
    %v946 = vpack.c.b16 %v930, %v928
    %v947 = vpack.c.b16 %v931, %v929
    %964 = vmatprep.subr.bf16.mxu0 %v947
    %965 = vmatpush1.bf16.msra.mxu0 %v946
    %966 = vmatprep.subr.bf16.mxu0 %v945
    %967 = vmatpush1.bf16.msra.mxu0 %v944
    %968 = vmatprep.subr.bf16.mxu0 %v943
    %969 = vmatpush1.bf16.msra.mxu0 %v942
    %970 = vmatprep.subr.bf16.mxu0 %v941
    %971 = vmatpush1.bf16.msra.mxu0 %v940
    %972 = vmatprep.subr.bf16.mxu0 %v939
    %973 = vmatpush1.bf16.msra.mxu0 %v938
    %974 = vmatprep.subr.bf16.mxu0 %v937
    %975 = vmatpush1.bf16.msra.mxu0 %v936
    %976 = vmatprep.subr.bf16.mxu0 %v935
    %977 = vmatpush1.bf16.msra.mxu0 %v934
    %978 = vmatprep.subr.bf16.mxu0 %v933
    %979 = vmatpush1.bf16.msra.mxu0 %v932
    %980 = vmatprep.subr.bf16.mxu0 0
    %981 = vmatpush2.bf16.msra.mxu0 0
    %982 = vmatprep.subr.bf16.mxu0 0
    %983 = vmatpush2.bf16.msra.mxu0 0
    %984 = vmatprep.subr.bf16.mxu0 0
    %985 = vmatpush2.bf16.msra.mxu0 0
    %986 = vmatprep.subr.bf16.mxu0 0
    %987 = vmatpush2.bf16.msra.mxu0 0
    %988 = vmatprep.subr.bf16.mxu0 0
    %989 = vmatpush2.bf16.msra.mxu0 0
    %990 = vmatprep.subr.bf16.mxu0 0
    %991 = vmatpush2.bf16.msra.mxu0 0
    %992 = vmatprep.subr.bf16.mxu0 0
    %993 = vmatpush2.bf16.msra.mxu0 0
    %994 = vmatprep.subr.bf16.mxu0 0
    %995 = vmatpush2.bf16.msra.mxu0 0
    %996 = vmatprep.mubr.bf16.mxu0 0
    %997 = vmatmul.mubr.bf16.gmra.mxu0 %v855
    %v998 = vpop.f32.mrf.mxu0
    %v999 = vadd.f32 %v877, %v998
    %v1000 = vpop.f32.mrf.mxu0
    %v1001 = vadd.f32 %v881, %v1000
    %v1002 = vpop.f32.mrf.mxu0
    %v1003 = vadd.f32 %v877, %v1002
    %v1004 = vpop.f32.mrf.mxu0
    %v1005 = vadd.f32 %v881, %v1004
    %1006 = vdwg.mxu0
    %v1007 = vmul.f32 %v999, 0.5
    %v1008 = vmul.f32 %v1001, 0.5
    %v1009 = vmul.f32 %v1003, 0.5
    %v1010 = vmul.f32 %v1005, 0.5
    %v1011 = vmul.f32 %v999, 0.70710677
    %v1012 = vmul.f32 %v1001, 0.70710677
    %v1013 = vmul.f32 %v1003, 0.70710677
    %v1014 = vmul.f32 %v1005, 0.70710677
    %v1015 = vand.u32 2147483647, %v1011
    %v1016 = vand.u32 2147483647, %v1012
    %v1017 = vand.u32 2147483647, %v1013
    %v1018 = vand.u32 2147483647, %v1014
    %v1019 = vmul.f32 %v1015, 0.3275911
    %v1020 = vmul.f32 %v1016, 0.3275911
    %v1021 = vmul.f32 %v1017, 0.3275911
    %v1022 = vmul.f32 %v1018, 0.3275911
    %v1023 = vadd.f32 %v1019, 1.0
    %v1024 = vadd.f32 %v1020, 1.0
    %v1025 = vadd.f32 %v1021, 1.0
    %v1026 = vadd.f32 %v1022, 1.0
    %v1027 = vrcp.pop %v1023
    %v1028 = vrcp.pop %v1024
    %v1029 = vrcp.pop %v1025
    %v1030 = vrcp.pop %v1026
    %v1031 = vmul.f32 %v1027, 1.0614054
    %v1032 = vmul.f32 %v1028, 1.0614054
    %v1033 = vmul.f32 %v1029, 1.0614054
    %v1034 = vmul.f32 %v1030, 1.0614054
    %v1035 = vadd.f32 %v1031, -1.4531521
    %v1036 = vadd.f32 %v1032, -1.4531521
    %v1037 = vadd.f32 %v1033, -1.4531521
    %v1038 = vadd.f32 %v1034, -1.4531521
    %v1039 = vmul.f32 %v1035, %v1027
    %v1040 = vmul.f32 %v1036, %v1028
    %v1041 = vmul.f32 %v1037, %v1029
    %v1042 = vmul.f32 %v1038, %v1030
    %v1043 = vadd.f32 %v1039, 1.4214138
    %v1044 = vadd.f32 %v1040, 1.4214138
    %v1045 = vadd.f32 %v1041, 1.4214138
    %v1046 = vadd.f32 %v1042, 1.4214138
    %v1047 = vmul.f32 %v1043, %v1027
    %v1048 = vmul.f32 %v1044, %v1028
    %v1049 = vmul.f32 %v1045, %v1029
    %v1050 = vmul.f32 %v1046, %v1030
    %v1051 = vadd.f32 %v1047, -0.28449672
    %v1052 = vadd.f32 %v1048, -0.28449672
    %v1053 = vadd.f32 %v1049, -0.28449672
    %v1054 = vadd.f32 %v1050, -0.28449672
    %v1055 = vmul.f32 %v1051, %v1027
    %v1056 = vmul.f32 %v1052, %v1028
    %v1057 = vmul.f32 %v1053, %v1029
    %v1058 = vmul.f32 %v1054, %v1030
    %v1059 = vadd.f32 %v1055, 0.2548296
    %v1060 = vadd.f32 %v1056, 0.2548296
    %v1061 = vadd.f32 %v1057, 0.2548296
    %v1062 = vadd.f32 %v1058, 0.2548296
    %v1063 = vmul.f32 %v1059, %v1027
    %v1064 = vmul.f32 %v1060, %v1028
    %v1065 = vmul.f32 %v1061, %v1029
    %v1066 = vmul.f32 %v1062, %v1030
    %v1067 = vsub.f32 0.0, %v1015
    %v1068 = vsub.f32 0.0, %v1016
    %v1069 = vsub.f32 0.0, %v1017
    %v1070 = vsub.f32 0.0, %v1018
    %v1071 = vmul.f32 %v1067, %v1015
    %v1072 = vmul.f32 %v1068, %v1016
    %v1073 = vmul.f32 %v1069, %v1017
    %v1074 = vmul.f32 %v1070, %v1018
    %v1075 = vmul.f32 %v1071, 1.442695
    %v1076 = vpow.pop %v1075
    %v1077 = vmul.f32 %v1072, 1.442695
    %v1078 = vpow.pop %v1077
    %v1079 = vmul.f32 %v1073, 1.442695
    %v1080 = vpow.pop %v1079
    %v1081 = vmul.f32 %v1074, 1.442695
    %v1082 = vpow.pop %v1081
    %v1083 = vmul.f32 %v1063, %v1076
    %v1084 = vmul.f32 %v1064, %v1078
    %v1085 = vmul.f32 %v1065, %v1080
    %v1086 = vmul.f32 %v1066, %v1082
    %v1087 = vsub.f32 1.0, %v1083
    %v1088 = vsub.f32 1.0, %v1084
    %v1089 = vsub.f32 1.0, %v1085
    %v1090 = vsub.f32 1.0, %v1086
    %vm1091 = vcmp.ge.f32.partialorder %v1011, 0.0
    %vm1092 = vcmp.ge.f32.partialorder %v1012, 0.0
    %vm1093 = vcmp.ge.f32.partialorder %v1013, 0.0
    %vm1094 = vcmp.ge.f32.partialorder %v1014, 0.0
    %v1095 = vsub.f32 0.0, %v1087
    %v1096 = vsub.f32 0.0, %v1088
    %v1097 = vsub.f32 0.0, %v1089
    %v1098 = vsub.f32 0.0, %v1090
    %v1099 = vsel %vm1091, %v1087, %v1095
    %v1100 = vsel %vm1092, %v1088, %v1096
    %v1101 = vsel %vm1093, %v1089, %v1097
    %v1102 = vsel %vm1094, %v1090, %v1098
    %v1103 = vadd.f32 %v1099, 1.0
    %v1104 = vadd.f32 %v1100, 1.0
    %v1105 = vadd.f32 %v1101, 1.0
    %v1106 = vadd.f32 %v1102, 1.0
    %v1107 = vmul.f32 %v1007, %v1103
    %v1108 = vmul.f32 %v1008, %v1104
    %v1109 = vmul.f32 %v1009, %v1105
    %v1110 = vmul.f32 %v1010, %v1106
    %v1111 = vpack.c.bf16 %v1109, %v1107
    %v1112 = vpack.c.bf16 %v1110, %v1108
    %v1113 = vld [vmem:[#allocation10] sm:$0xf]
    %v1114 = vld [vmem:[#allocation10 + $0x4] sm:$0xf]
    %v1115 = vld [vmem:[#allocation10 + $0x8] sm:$0xf]
    %v1116 = vld [vmem:[#allocation10 + $0xc] sm:$0xf]
    %v1117 = vld [vmem:[#allocation10 + $0x10] sm:$0xf]
    %v1118 = vld [vmem:[#allocation10 + $0x14] sm:$0xf]
    %v1119 = vld [vmem:[#allocation10 + $0x18] sm:$0xf]
    %v1120 = vld [vmem:[#allocation10 + $0x1c] sm:$0xf]
    %v1121 = vld [vmem:[#allocation10 + $0x20] sm:$0xf]
    %v1122 = vld [vmem:[#allocation10 + $0x24] sm:$0xf]
    %v1123 = vld [vmem:[#allocation10 + $0x28] sm:$0xf]
    %v1124 = vld [vmem:[#allocation10 + $0x2c] sm:$0xf]
    %v1125 = vld [vmem:[#allocation10 + $0x30] sm:$0xf]
    %v1126 = vld [vmem:[#allocation10 + $0x34] sm:$0xf]
    %v1127 = vld [vmem:[#allocation10 + $0x38] sm:$0xf]
    %v1128 = vld [vmem:[#allocation10 + $0x3c] sm:$0xf]
    %v1129 = vld [vmem:[#allocation10 + $0x40] sm:$0xf]
    %v1130 = vld [vmem:[#allocation10 + $0x44] sm:$0xf]
    %v1131 = vld [vmem:[#allocation10 + $0x48] sm:$0xf]
    %v1132 = vld [vmem:[#allocation10 + $0x4c] sm:$0xf]
    %v1133 = vld [vmem:[#allocation10 + $0x50] sm:$0xf]
    %v1134 = vld [vmem:[#allocation10 + $0x54] sm:$0xf]
    %v1135 = vld [vmem:[#allocation10 + $0x58] sm:$0xf]
    %v1136 = vld [vmem:[#allocation10 + $0x5c] sm:$0xf]
    %v1137 = vld [vmem:[#allocation10 + $0x60] sm:$0xf]
    %v1138 = vld [vmem:[#allocation10 + $0x64] sm:$0xf]
    %v1139 = vld [vmem:[#allocation10 + $0x68] sm:$0xf]
    %v1140 = vld [vmem:[#allocation10 + $0x6c] sm:$0xf]
    %v1141 = vld [vmem:[#allocation10 + $0x70] sm:$0xf]
    %v1142 = vld [vmem:[#allocation10 + $0x74] sm:$0xf]
    %v1143 = vld [vmem:[#allocation10 + $0x78] sm:$0xf]
    %v1144 = vld [vmem:[#allocation10 + $0x7c] sm:$0xf]
    %v1145 = vlaneseq
    %v1146 = vshrl.u32 %v1145, 7
    %v1147 = vsub.s32 3, %v1146
    %v1148 = vrot.slane %v125, %v1147
    %v1181 = vunpack.c.l.b16 %v1113
    %v1182 = vunpack.c.l.b16 %v1114
    %v1183 = vunpack.c.l.b16 %v1115
    %v1184 = vunpack.c.l.b16 %v1116
    %v1185 = vunpack.c.l.b16 %v1117
    %v1186 = vunpack.c.l.b16 %v1118
    %v1187 = vunpack.c.l.b16 %v1119
    %v1188 = vunpack.c.l.b16 %v1120
    %v1189 = vunpack.c.l.b16 %v1121
    %v1190 = vunpack.c.l.b16 %v1122
    %v1191 = vunpack.c.l.b16 %v1123
    %v1192 = vunpack.c.l.b16 %v1124
    %v1193 = vunpack.c.l.b16 %v1125
    %v1194 = vunpack.c.l.b16 %v1126
    %v1195 = vunpack.c.l.b16 %v1127
    %v1196 = vunpack.c.l.b16 %v1128
    %v1197 = vunpack.c.l.b16 %v1129
    %v1198 = vunpack.c.l.b16 %v1130
    %v1199 = vunpack.c.l.b16 %v1131
    %v1200 = vunpack.c.l.b16 %v1132
    %v1201 = vunpack.c.l.b16 %v1133
    %v1202 = vunpack.c.l.b16 %v1134
    %v1203 = vunpack.c.l.b16 %v1135
    %v1204 = vunpack.c.l.b16 %v1136
    %v1205 = vunpack.c.l.b16 %v1137
    %v1206 = vunpack.c.l.b16 %v1138
    %v1207 = vunpack.c.l.b16 %v1139
    %v1208 = vunpack.c.l.b16 %v1140
    %v1209 = vunpack.c.l.b16 %v1141
    %v1210 = vunpack.c.l.b16 %v1142
    %v1211 = vunpack.c.l.b16 %v1143
    %v1212 = vunpack.c.l.b16 %v1144
    %v1213 = vpack.c.b16 %v1182, %v1181
    %v1214 = vpack.c.b16 %v1184, %v1183
    %v1215 = vpack.c.b16 %v1186, %v1185
    %v1216 = vpack.c.b16 %v1188, %v1187
    %v1217 = vpack.c.b16 %v1190, %v1189
    %v1218 = vpack.c.b16 %v1192, %v1191
    %v1219 = vpack.c.b16 %v1194, %v1193
    %v1220 = vpack.c.b16 %v1196, %v1195
    %v1221 = vpack.c.b16 %v1198, %v1197
    %v1222 = vpack.c.b16 %v1200, %v1199
    %v1223 = vpack.c.b16 %v1202, %v1201
    %v1224 = vpack.c.b16 %v1204, %v1203
    %v1225 = vpack.c.b16 %v1206, %v1205
    %v1226 = vpack.c.b16 %v1208, %v1207
    %v1227 = vpack.c.b16 %v1210, %v1209
    %v1228 = vpack.c.b16 %v1212, %v1211
    %1245 = vmatprep.subr.bf16.mxu0 0
    %1246 = vmatpush1.bf16.msra.mxu0 %v1220
    %1247 = vmatprep.subr.bf16.mxu0 0
    %1248 = vmatpush1.bf16.msra.mxu0 %v1219
    %1249 = vmatprep.subr.bf16.mxu0 0
    %1250 = vmatpush1.bf16.msra.mxu0 %v1218
    %1251 = vmatprep.subr.bf16.mxu0 0
    %1252 = vmatpush1.bf16.msra.mxu0 %v1217
    %1253 = vmatprep.subr.bf16.mxu0 0
    %1254 = vmatpush1.bf16.msra.mxu0 %v1216
    %1255 = vmatprep.subr.bf16.mxu0 0
    %1256 = vmatpush1.bf16.msra.mxu0 %v1215
    %1257 = vmatprep.subr.bf16.mxu0 0
    %1258 = vmatpush1.bf16.msra.mxu0 %v1214
    %1259 = vmatprep.subr.bf16.mxu0 0
    %1260 = vmatpush1.bf16.msra.mxu0 %v1213
    %1261 = vmatprep.subr.bf16.mxu0 0
    %1262 = vmatpush2.bf16.msra.mxu0 %v1228
    %1263 = vmatprep.subr.bf16.mxu0 0
    %1264 = vmatpush2.bf16.msra.mxu0 %v1227
    %1265 = vmatprep.subr.bf16.mxu0 0
    %1266 = vmatpush2.bf16.msra.mxu0 %v1226
    %1267 = vmatprep.subr.bf16.mxu0 0
    %1268 = vmatpush2.bf16.msra.mxu0 %v1225
    %1269 = vmatprep.subr.bf16.mxu0 0
    %1270 = vmatpush2.bf16.msra.mxu0 %v1224
    %1271 = vmatprep.subr.bf16.mxu0 0
    %1272 = vmatpush2.bf16.msra.mxu0 %v1223
    %1273 = vmatprep.subr.bf16.mxu0 0
    %1274 = vmatpush2.bf16.msra.mxu0 %v1222
    %1275 = vmatprep.subr.bf16.mxu0 0
    %1276 = vmatpush2.bf16.msra.mxu0 %v1221
    %1277 = vmatprep.mubr.bf16.mxu0 %v1112
    %1278 = vmatmul.mubr.bf16.gmra.mxu0 %v1111
    %v1279 = vpop.f32.mrf.mxu0
    %v1280 = vadd.f32 %v1148, %v1279
    %v1281 = vpop.f32.mrf.mxu0
    %v1282 = vpop.f32.mrf.mxu0
    %v1283 = vadd.f32 %v1148, %v1282
    %v1284 = vpop.f32.mrf.mxu0
    %1285 = vdwg.mxu0
    %v1286 = vadd.f32 %v853, %v1280
    %v1287 = vadd.f32 %v854, %v1283
    %1288 = vadd.xlane.f32.xlu0 %v1286
    %v1289 = vpop.xlane.xlu0 %1288
    %1290 = vadd.xlane.f32.xlu0 %v1287
    %v1291 = vpop.xlane.xlu0 %1290
    %v1292 = vmul.f32 %v1289, %v820
    %v1293 = vmul.f32 %v1291, %v820
    %v1294 = vmul.f32 %v1286, %v1286
    %v1295 = vmul.f32 %v1287, %v1287
    %1296 = vadd.xlane.f32.xlu0 %v1294
    %v1297 = vpop.xlane.xlu0 %1296
    %1298 = vadd.xlane.f32.xlu0 %v1295
    %v1299 = vpop.xlane.xlu0 %1298
    %v1300 = vmul.f32 %v1297, %v820
    %v1301 = vmul.f32 %v1299, %v820
    %v1302 = vmul.f32 %v1292, %v1292
    %v1303 = vmul.f32 %v1293, %v1293
    %v1304 = vsub.f32 %v1300, %v1302
    %v1305 = vsub.f32 %v1301, %v1303
    %v1306 = vsub.f32 %v1286, %v1292
    %v1307 = vsub.f32 %v1287, %v1293
    %v1308 = vadd.f32 %v1304, 1e-12
    %v1309 = vadd.f32 %v1305, 1e-12
    %v1310 = vrsqrt.pop %v1308
    %v1311 = vrsqrt.pop %v1309
    %v1312 = vmul.f32 %v1306, %v1310
    %v1313 = vmul.f32 %v1307, %v1311
    %v1314 = vlaneseq
    %v1315 = vshrl.u32 %v1314, 7
    %v1316 = vsub.s32 4, %v1315
    %v1317 = vrot.slane %v125, %v1316
    %v1318 = vmul.f32 %v1312, %v1317
    %v1319 = vmul.f32 %v1313, %v1317
    %v1320 = vlaneseq
    %v1321 = vshrl.u32 %v1320, 7
    %v1322 = vsub.s32 5, %v1321
    %v1323 = vrot.slane %v125, %v1322
    %v1324 = vadd.f32 %v1318, %v1323
    %v1325 = vadd.f32 %v1319, %v1323
    %v1326 = vpack.c.bf16 %v1324, %v1324
    %v1327 = vpack.c.bf16 %v1325, %v1325
    %v1328 = vld [vmem:[#allocation11] sm:$0xf]
    %v1329 = vld [vmem:[#allocation11 + $0x4] sm:$0xf]
    %v1330 = vld [vmem:[#allocation11 + $0x8] sm:$0xf]
    %v1331 = vld [vmem:[#allocation11 + $0xc] sm:$0xf]
    %v1332 = vld [vmem:[#allocation11 + $0x10] sm:$0xf]
    %v1333 = vld [vmem:[#allocation11 + $0x14] sm:$0xf]
    %v1334 = vld [vmem:[#allocation11 + $0x18] sm:$0xf]
    %v1335 = vld [vmem:[#allocation11 + $0x1c] sm:$0xf]
    %v1336 = vld [vmem:[#allocation11 + $0x20] sm:$0xf]
    %v1337 = vld [vmem:[#allocation11 + $0x24] sm:$0xf]
    %v1338 = vld [vmem:[#allocation11 + $0x28] sm:$0xf]
    %v1339 = vld [vmem:[#allocation11 + $0x2c] sm:$0xf]
    %v1340 = vld [vmem:[#allocation11 + $0x30] sm:$0xf]
    %v1341 = vld [vmem:[#allocation11 + $0x34] sm:$0xf]
    %v1342 = vld [vmem:[#allocation11 + $0x38] sm:$0xf]
    %v1343 = vld [vmem:[#allocation11 + $0x3c] sm:$0xf]
    %v1344 = vld [vmem:[%s11] sm:$0x1]
    %v1346 = vlaneseq
    %v1347 = vshrl.u32 %v1346, 7
    %v1348 = vsub.s32 0, %v1347
    %v1349 = vrot.slane %v1344, %v1348
    %v1353 = vunpack.c.l.b16 %v1326
    %v1354 = vunpack.c.l.b16 %v1327
    %v1355 = vrot.slane %v1354, 7
    %vm1356 = vcmask 1041409
    %v1357 = vsel %vm1356, %v1355, %v1353
    %v1358 = vpack.c.b16 %v1357, %v1357
    %v1376 = vunpack.c.l.b16 %v1328
    %v1377 = vunpack.c.l.b16 %v1329
    %v1378 = vunpack.c.l.b16 %v1330
    %v1379 = vunpack.c.l.b16 %v1331
    %v1380 = vunpack.c.l.b16 %v1332
    %v1381 = vunpack.c.l.b16 %v1333
    %v1382 = vunpack.c.l.b16 %v1334
    %v1383 = vunpack.c.l.b16 %v1335
    %v1384 = vunpack.c.l.b16 %v1336
    %v1385 = vunpack.c.l.b16 %v1337
    %v1386 = vunpack.c.l.b16 %v1338
    %v1387 = vunpack.c.l.b16 %v1339
    %v1388 = vunpack.c.l.b16 %v1340
    %v1389 = vunpack.c.l.b16 %v1341
    %v1390 = vunpack.c.l.b16 %v1342
    %v1391 = vunpack.c.l.b16 %v1343
    %v1392 = vpack.c.b16 %v1377, %v1376
    %v1393 = vpack.c.b16 %v1379, %v1378
    %v1394 = vpack.c.b16 %v1381, %v1380
    %v1395 = vpack.c.b16 %v1383, %v1382
    %v1396 = vpack.c.b16 %v1385, %v1384
    %v1397 = vpack.c.b16 %v1387, %v1386
    %v1398 = vpack.c.b16 %v1389, %v1388
    %v1399 = vpack.c.b16 %v1391, %v1390
    %1408 = vmatprep.subr.bf16.mxu0 0
    %1409 = vmatpush1.bf16.msra.mxu0 %v1399
    %1410 = vmatprep.subr.bf16.mxu0 0
    %1411 = vmatpush1.bf16.msra.mxu0 %v1398
    %1412 = vmatprep.subr.bf16.mxu0 0
    %1413 = vmatpush1.bf16.msra.mxu0 %v1397
    %1414 = vmatprep.subr.bf16.mxu0 0
    %1415 = vmatpush1.bf16.msra.mxu0 %v1396
    %1416 = vmatprep.subr.bf16.mxu0 0
    %1417 = vmatpush1.bf16.msra.mxu0 %v1395
    %1418 = vmatprep.subr.bf16.mxu0 0
    %1419 = vmatpush1.bf16.msra.mxu0 %v1394
    %1420 = vmatprep.subr.bf16.mxu0 0
    %1421 = vmatpush1.bf16.msra.mxu0 %v1393
    %1422 = vmatprep.subr.bf16.mxu0 0
    %1423 = vmatpush1.bf16.msra.mxu0 %v1392
    %1424 = vmatprep.subr.bf16.mxu0 0
    %1425 = vmatpush2.bf16.msra.mxu0 0
    %1426 = vmatprep.subr.bf16.mxu0 0
    %1427 = vmatpush2.bf16.msra.mxu0 0
    %1428 = vmatprep.subr.bf16.mxu0 0
    %1429 = vmatpush2.bf16.msra.mxu0 0
    %1430 = vmatprep.subr.bf16.mxu0 0
    %1431 = vmatpush2.bf16.msra.mxu0 0
    %1432 = vmatprep.subr.bf16.mxu0 0
    %1433 = vmatpush2.bf16.msra.mxu0 0
    %1434 = vmatprep.subr.bf16.mxu0 0
    %1435 = vmatpush2.bf16.msra.mxu0 0
    %1436 = vmatprep.subr.bf16.mxu0 0
    %1437 = vmatpush2.bf16.msra.mxu0 0
    %1438 = vmatprep.subr.bf16.mxu0 0
    %1439 = vmatpush2.bf16.msra.mxu0 0
    %1440 = vmatprep.mubr.bf16.mxu0 0
    %1441 = vmatmul.mubr.bf16.gmra.mxu0 %v1358
    %v1442 = vpop.f32.mrf.mxu0
    %v1443 = vadd.f32 %v1349, %v1442
    %v1444 = vpop.f32.mrf.mxu0
    %v1445 = vpop.f32.mrf.mxu0
    %v1446 = vpop.f32.mrf.mxu0
    %1447 = vdwg.mxu0
    %1448 = vst [vmem:[#allocation13] sm:$0x3] %v1443
    // Predicated region
    $region74: #{tpu_custom_call.1} parent=1 // pred_check
      _
    $region75: #{tpu_custom_call.1} parent=1 // pred_check_branch
      %1450 = sbr.rel (0) target = $region77
    $region76: #{tpu_custom_call.1} parent=1 // pred_region
      %s1452 = ssub.s32 32, 32
      %1453 = vsyncadd [#allocation4], %s1452
      %s1455 = sshll.u32 [#allocation13], 4
      %s1456 = int_to_ptr.vmem [resolvable:$true] %s1455
      %1458 = dma.vmem_to_hbm [thread:$0]  %s1456, 32, %s12, [#allocation4]
    $region77: #{tpu_custom_call.1} parent=1 // pred_fallthru
      _
    // Predicated region
    $region78: #{tpu_custom_call.1} parent=1 // pred_check
      _
    $region79: #{tpu_custom_call.1} parent=1 // pred_check_branch
      %1460 = sbr.rel (0) target = $region81
    $region80: #{tpu_custom_call.1} parent=1 // pred_region
      %1461 = dma.done [#allocation4], 32
    $region81: #{tpu_custom_call.1} parent=1 // pred_fallthru
      _
    %1462 = vsyncpa [#allocation3], 1
    %1463 = vsyncpa [#allocation6], 1
    %1464 = vsyncpa [#allocation9], 1
    %1465 = vsyncpa [#allocation12], 1
    %1466 = vsyncpa [#allocation4], 1

</llo_original>
